<compile_context>
chip_gen: v7x
topology: tpu7x:2x2x1
jax: 0.10.0
libtpu: 0.0.40
codegen_flags: <defaults>
</compile_context>

<pallas_src>
import functools

import jax
import jax.numpy as jnp
from jax import lax
from jax.experimental import pallas as pl
from jax.experimental.pallas import tpu as pltpu


def _up_conv_kernel(x_ref, e_ref, w_ref, s_ref, o_ref, flat_ref, *,
                    H_in, W_in, C_in, C_out_t, scale):
    """One (batch, C_out-tile) grid step.

    x_ref   : (1, C_in*H_in, W_in)  bf16  input, rows ordered (channel, row)
    e_ref   : (W_in, 3*scale*W)     bf16  0/1 width-upsample+pad+kw-shift matrix
    w_ref   : (3, C_out_t, 3*C_in)  bf16  BN-folded weights, [kh, o, kw*C_in+c]
    s_ref   : (C_out_t, 1)          f32   folded conv-bias + BN shift
    o_ref   : (1, C_out_t, H*W)     f32   output, NCHW flattened over (H, W)
    flat_ref: (3*C_in, (H+2)*W)     bf16  VMEM scratch: padded upsampled rows,
              flattened so the kh tap is a pure lane slice at offset kh*W.
    """
    H = H_in * scale
    W = W_in * scale
    sW = scale * W
    f32 = jnp.float32
    bf16 = jnp.bfloat16

    # (1)+(2) Width upsample + 'same' pad + kw tap shift (one MXU matmul with
    # the constant 0/1 matrix E) and height upsample (a single coarse
    # relayout).  Done once per batch element, on the first C_out tile; the
    # scratch persists across the (sequential, per-core) C_out grid axis.
    @pl.when(pl.program_id(1) == 0)
    def _fill_flat():
        # (C_in*H_in, W_in) @ (W_in, 3*s*W): rows are (channel, source_row),
        # and inside each kw block the lanes are (s_copy, w).
        y_all = jnp.dot(x_ref[0], e_ref[...], preferred_element_type=f32)

        # Top/bottom 'same'-padding rows (cheap; kept unconditional per batch
        # so it stays correct under megacore sharding of the batch axis).
        zpad = jnp.zeros((3 * C_in, W), dtype=bf16)
        flat_ref[:, 0:W] = zpad
        flat_ref[:, (H + 1) * W:(H + 2) * W] = zpad

        # Height upsample: rows (c, r) with lanes (copy, w) reshape directly
        # into (c, (r, copy, w)) = (C_in, H*W) -- one coarse store per kw tap
        # instead of 3*H_in sub-vreg scatters.
        for kw in range(3):
            blk = y_all[:, kw * sW:(kw + 1) * sW].reshape(C_in, H * W)
            flat_ref[kw * C_in:(kw + 1) * C_in, W:(H + 1) * W] = blk.astype(bf16)

    # (3) 3x3 conv as 3 bf16 MXU matmuls: K = 3*C_in (kw folded into the
    # contraction), N = H*W lanes; the kh tap is a lane shift of one output
    # row (W).  Accumulator is (C_out_t, H*W) f32: lane-dense.
    acc = jnp.zeros((C_out_t, H * W), dtype=f32)
    for kh in range(3):
        acc = acc + jnp.dot(w_ref[kh],
                            flat_ref[:, kh * W: kh * W + H * W],
                            preferred_element_type=f32)

    # (4) folded conv-bias + BN shift, ReLU; lane-dense NCHW-flattened output.
    o_ref[0] = jnp.maximum(acc + s_ref[...], 0.0).astype(o_ref.dtype)


@functools.partial(jax.jit, static_argnames=("scale_factor",))
def up_conv_forward(x_nchw, w_oihw, bias, gamma, beta, run_mean, run_var,
                    scale_factor=4, eps=1e-5):
    """Forward pass of up_conv. Input NCHW, returns NCHW (float32)."""
    N, C_in, H_in, W_in = x_nchw.shape
    C_out = w_oihw.shape[0]
    s = scale_factor
    H, W = H_in * s, W_in * s

    # C_out tile: MXU-native 128 when it divides C_out, else the whole thing.
    co_t = 128 if (C_out % 128 == 0) else C_out
    n_co = C_out // co_t

    # ---- glue (cheap: pre-upsample-sized input + tiny constants) ----
    # Rows ordered (channel, source_row): just a view of NCHW, no transpose.
    x_r = x_nchw.reshape(N, C_in * H_in, W_in).astype(jnp.bfloat16)

    # E: width nearest-upsample + 'same' padding + kw tap shift + s-fold
    # row replication, folded into one (W_in, 3*s*W) 0/1 matrix (exact in bf16).
    j = jnp.arange(W)
    e_blocks = []
    for kw in range(3):
        col = j + kw - 1
        valid = (col >= 0) & (col < W)
        src = jnp.clip(col, 0, W - 1) // s
        e_kw = ((src[None, :] == jnp.arange(W_in)[:, None]) &
                valid[None, :]).astype(jnp.float32)           # (W_in, W)
        e_blocks.append(jnp.tile(e_kw, (1, s)))               # (W_in, s*W)
    e_all = jnp.concatenate(e_blocks, axis=1).astype(jnp.bfloat16)

    # Fold BN scale into the conv weights; fold conv bias + BN shift together.
    bn_scale = gamma * lax.rsqrt(run_var + eps)
    w_f = jnp.transpose(w_oihw, (2, 3, 0, 1)) * bn_scale[None, None, :, None]
    w_f = jnp.transpose(w_f, (0, 2, 1, 3)).reshape(3, C_out, 3 * C_in)
    shift = ((bias - run_mean) * bn_scale + beta).reshape(C_out, 1)

    kernel = functools.partial(_up_conv_kernel, H_in=H_in, W_in=W_in,
                               C_in=C_in, C_out_t=co_t, scale=s)

    out_flat = pl.pallas_call(
        kernel,
        out_shape=jax.ShapeDtypeStruct((N, C_out, H * W), jnp.float32),
        grid_spec=pltpu.PrefetchScalarGridSpec(
            num_scalar_prefetch=0,
            grid=(N, n_co),
            in_specs=[
                pl.BlockSpec((1, C_in * H_in, W_in), lambda n, c: (n, 0, 0)),
                pl.BlockSpec((W_in, 3 * s * W), lambda n, c: (0, 0)),
                pl.BlockSpec((3, co_t, 3 * C_in), lambda n, c: (0, c, 0)),
                pl.BlockSpec((co_t, 1), lambda n, c: (c, 0)),
            ],
            out_specs=pl.BlockSpec((1, co_t, H * W), lambda n, c: (n, c, 0)),
            scratch_shapes=[
                pltpu.VMEM((3 * C_in, (H + 2) * W), jnp.bfloat16),
            ],
        ),
        compiler_params=pltpu.CompilerParams(
            dimension_semantics=("parallel", "arbitrary"),
            # explicit scoped-VMEM budget; headroom below v7x's 64 MiB physical
            vmem_limit_bytes=48 * 1024 * 1024),
    )(x_r, e_all, w_f.astype(jnp.bfloat16), shift.astype(jnp.float32))

    # Free, contiguous reshape: (N, C_out, H*W) -> NCHW. No transpose.
    return out_flat.reshape(N, C_out, H, W)


def _reference(x_nchw, w_oihw, bias, gamma, beta, run_mean, run_var,
               scale_factor=4, eps=1e-5):
    """Pure-JAX f32 reference for validation."""
    x_nhwc = jnp.transpose(x_nchw, (0, 2, 3, 1))
    x_up = jnp.repeat(jnp.repeat(x_nhwc, scale_factor, axis=1),
                      scale_factor, axis=2)
    w_hwio = jnp.transpose(w_oihw, (2, 3, 1, 0))
    y = lax.conv_general_dilated(
        x_up, w_hwio, window_strides=(1, 1), padding="SAME",
        dimension_numbers=("NHWC", "HWIO", "NHWC"))
    y = y + bias
    scale = gamma * lax.rsqrt(run_var + eps)
    shift = beta - run_mean * scale
    y = y * scale + shift
    y = jnp.maximum(y, 0.0)
    return jnp.transpose(y, (0, 3, 1, 2))


if __name__ == "__main__":
    key = jax.random.PRNGKey(0)
    k_x, k_w, k_b, k_g, k_be, k_m, k_v = jax.random.split(key, 7)

    N, C_in, C_out, H_in, W_in = 2, 4, 8, 8, 8

    x = jax.random.normal(k_x, (N, C_in, H_in, W_in), dtype=jnp.float32)
    w = jax.random.normal(k_w, (C_out, C_in, 3, 3), dtype=jnp.float32) * 0.1
    b = jax.random.normal(k_b, (C_out,), dtype=jnp.float32) * 0.1
    gamma = 1.0 + 0.1 * jax.random.normal(k_g, (C_out,), dtype=jnp.float32)
    beta = 0.1 * jax.random.normal(k_be, (C_out,), dtype=jnp.float32)
    run_mean = 0.1 * jax.random.normal(k_m, (C_out,), dtype=jnp.float32)
    run_var = jnp.abs(1.0 + 0.1 * jax.random.normal(k_v, (C_out,),
                                                    dtype=jnp.float32))

    out = up_conv_forward(x, w, b, gamma, beta, run_mean, run_var)
    out = jax.block_until_ready(out)

    ref = _reference(x, w, b, gamma, beta, run_mean, run_var)
    assert out.shape == (N, C_out, H_in * 4, W_in * 4), out.shape
    # bf16 MXU inputs (f32 accumulate) -> ~1e-2-level error vs the f32 reference.
    assert jnp.allclose(out, ref, atol=5e-2, rtol=5e-2), "mismatch vs reference"

    print("KERNEL_OK")
</pallas_src>

<mosaic_0001>
module attributes {stable_mosaic.version = 11 : i64} {
  func.func @_up_conv_kernel(%arg0: i32, %arg1: i32, %arg2: memref<1x32x8xbf16, #tpu.memory_space<vmem>>, %arg3: memref<8x384xbf16, #tpu.memory_space<vmem>>, %arg4: memref<3x8x12xbf16, #tpu.memory_space<vmem>>, %arg5: memref<8x1xf32, #tpu.memory_space<vmem>>, %arg6: memref<1x8x1024xf32, #tpu.memory_space<vmem>>, %arg7: memref<12x1088xbf16, #tpu.memory_space<vmem>>) attributes {dimension_semantics = [#tpu.dimension_semantics<parallel>, #tpu.dimension_semantics<arbitrary>], iteration_bounds = array<i64: 2, 1>, scalar_prefetch = 0 : i64, scratch_operands = 1 : i64, tpu.core_type = #tpu.core_type<tc>, window_params = [{transform_indices = @transform_0, window_bounds = array<i64: 1, 32, 8>}, {pipeline_mode = #tpu.pipeline_mode<synchronous>, transform_indices = @transform_1, window_bounds = array<i64: 8, 384>}, {transform_indices = @transform_2, window_bounds = array<i64: 3, 8, 12>}, {transform_indices = @transform_3, window_bounds = array<i64: 8, 1>}, {transform_indices = @transform_4, window_bounds = array<i64: 1, 8, 1024>}]} {
    %c0_i32 = arith.constant 0 : i32
    %0 = arith.cmpi eq, %arg1, %c0_i32 : i32
    %1 = arith.extui %0 : i1 to i32
    %c0_i32_0 = arith.constant 0 : i32
    %2 = arith.cmpi ne, %1, %c0_i32_0 : i32
    scf.if %2 {
      %c0_20 = arith.constant 0 : index
      %c0_21 = arith.constant 0 : index
      %c0_22 = arith.constant 0 : index
      %27 = vector.load %arg2[%c0_20, %c0_21, %c0_22] : memref<1x32x8xbf16, #tpu.memory_space<vmem>>, vector<1x32x8xbf16>
      %28 = vector.shape_cast %27 : vector<1x32x8xbf16> to vector<32x8xbf16>
      %c0_23 = arith.constant 0 : index
      %c0_24 = arith.constant 0 : index
      %29 = vector.load %arg3[%c0_23, %c0_24] : memref<8x384xbf16, #tpu.memory_space<vmem>>, vector<8x384xbf16>
      %cst_25 = arith.constant dense<0.000000e+00> : vector<32x384xf32>
      %30 = tpu.matmul %28, %29, %cst_25 {dimension_numbers = #tpu.dot_dimension_numbers<[1], [0], [0], [1], [0, 0, 1, 1], [], []>} : vector<32x8xbf16>, vector<8x384xbf16>, vector<32x384xf32> -> vector<32x384xf32>
      %cst_26 = arith.constant 0.000000e+00 : bf16
      %31 = vector.broadcast %cst_26 : bf16 to vector<12x32xbf16>
      %c0_27 = arith.constant 0 : index
      %c0_28 = arith.constant 0 : index
      %32 = vector.load %arg7[%c0_27, %c0_28] : memref<12x1088xbf16, #tpu.memory_space<vmem>>, vector<12x32xbf16>
      tpu.vector_store %arg7[%c0_27, %c0_28], %31 {strides = array<i32>} : memref<12x1088xbf16, #tpu.memory_space<vmem>>, vector<12x32xbf16>,
      %c0_29 = arith.constant 0 : index
      %c1056 = arith.constant 1056 : index
      %33 = vector.load %arg7[%c0_29, %c1056] : memref<12x1088xbf16, #tpu.memory_space<vmem>>, vector<12x32xbf16>
      tpu.vector_store %arg7[%c0_29, %c1056], %31 {strides = array<i32>} : memref<12x1088xbf16, #tpu.memory_space<vmem>>, vector<12x32xbf16>,
      %34 = vector.extract_strided_slice %30 {offsets = [0, 0], sizes = [32, 128], strides = [1, 1]} : vector<32x384xf32> to vector<32x128xf32>
      %35 = vector.shape_cast %34 : vector<32x128xf32> to vector<4x1024xf32>
      %36 = arith.truncf %35 : vector<4x1024xf32> to vector<4x1024xbf16>
      %c0_30 = arith.constant 0 : index
      %c32_31 = arith.constant 32 : index
      %37 = vector.load %arg7[%c0_30, %c32_31] : memref<12x1088xbf16, #tpu.memory_space<vmem>>, vector<4x1024xbf16>
      tpu.vector_store %arg7[%c0_30, %c32_31], %36 {strides = array<i32>} : memref<12x1088xbf16, #tpu.memory_space<vmem>>, vector<4x1024xbf16>,
      %38 = vector.extract_strided_slice %30 {offsets = [0, 128], sizes = [32, 128], strides = [1, 1]} : vector<32x384xf32> to vector<32x128xf32>
      %39 = vector.shape_cast %38 : vector<32x128xf32> to vector<4x1024xf32>
      %40 = arith.truncf %39 : vector<4x1024xf32> to vector<4x1024xbf16>
      %c4 = arith.constant 4 : index
      %c32_32 = arith.constant 32 : index
      %41 = vector.load %arg7[%c4, %c32_32] : memref<12x1088xbf16, #tpu.memory_space<vmem>>, vector<4x1024xbf16>
      tpu.vector_store %arg7[%c4, %c32_32], %40 {strides = array<i32>} : memref<12x1088xbf16, #tpu.memory_space<vmem>>, vector<4x1024xbf16>,
      %42 = vector.extract_strided_slice %30 {offsets = [0, 256], sizes = [32, 128], strides = [1, 1]} : vector<32x384xf32> to vector<32x128xf32>
      %43 = vector.shape_cast %42 : vector<32x128xf32> to vector<4x1024xf32>
      %44 = arith.truncf %43 : vector<4x1024xf32> to vector<4x1024xbf16>
      %c8 = arith.constant 8 : index
      %c32_33 = arith.constant 32 : index
      %45 = vector.load %arg7[%c8, %c32_33] : memref<12x1088xbf16, #tpu.memory_space<vmem>>, vector<4x1024xbf16>
      tpu.vector_store %arg7[%c8, %c32_33], %44 {strides = array<i32>} : memref<12x1088xbf16, #tpu.memory_space<vmem>>, vector<4x1024xbf16>,
    } else {
    }
    %cst = arith.constant 0.000000e+00 : f32
    %3 = vector.broadcast %cst : f32 to vector<8x1024xf32>
    %c0 = arith.constant 0 : index
    %c0_1 = arith.constant 0 : index
    %c0_2 = arith.constant 0 : index
    %4 = vector.load %arg4[%c0, %c0_1, %c0_2] : memref<3x8x12xbf16, #tpu.memory_space<vmem>>, vector<1x8x12xbf16>
    %5 = vector.shape_cast %4 : vector<1x8x12xbf16> to vector<8x12xbf16>
    %c0_3 = arith.constant 0 : index
    %c0_4 = arith.constant 0 : index
    %6 = vector.load %arg7[%c0_3, %c0_4] : memref<12x1088xbf16, #tpu.memory_space<vmem>>, vector<12x1024xbf16>
    %cst_5 = arith.constant dense<0.000000e+00> : vector<8x1024xf32>
    %7 = tpu.matmul %5, %6, %cst_5 {dimension_numbers = #tpu.dot_dimension_numbers<[1], [0], [0], [1], [0, 0, 1, 1], [], []>} : vector<8x12xbf16>, vector<12x1024xbf16>, vector<8x1024xf32> -> vector<8x1024xf32>
    %8 = arith.addf %3, %7 : vector<8x1024xf32>
    %c1 = arith.constant 1 : index
    %c0_6 = arith.constant 0 : index
    %c0_7 = arith.constant 0 : index
    %9 = vector.load %arg4[%c1, %c0_6, %c0_7] : memref<3x8x12xbf16, #tpu.memory_space<vmem>>, vector<1x8x12xbf16>
    %10 = vector.shape_cast %9 : vector<1x8x12xbf16> to vector<8x12xbf16>
    %c0_8 = arith.constant 0 : index
    %c32 = arith.constant 32 : index
    %11 = vector.load %arg7[%c0_8, %c32] : memref<12x1088xbf16, #tpu.memory_space<vmem>>, vector<12x1024xbf16>
    %cst_9 = arith.constant dense<0.000000e+00> : vector<8x1024xf32>
    %12 = tpu.matmul %10, %11, %cst_9 {dimension_numbers = #tpu.dot_dimension_numbers<[1], [0], [0], [1], [0, 0, 1, 1], [], []>} : vector<8x12xbf16>, vector<12x1024xbf16>, vector<8x1024xf32> -> vector<8x1024xf32>
    %13 = arith.addf %8, %12 : vector<8x1024xf32>
    %c2 = arith.constant 2 : index
    %c0_10 = arith.constant 0 : index
    %c0_11 = arith.constant 0 : index
    %14 = vector.load %arg4[%c2, %c0_10, %c0_11] : memref<3x8x12xbf16, #tpu.memory_space<vmem>>, vector<1x8x12xbf16>
    %15 = vector.shape_cast %14 : vector<1x8x12xbf16> to vector<8x12xbf16>
    %c0_12 = arith.constant 0 : index
    %c64 = arith.constant 64 : index
    %16 = vector.load %arg7[%c0_12, %c64] : memref<12x1088xbf16, #tpu.memory_space<vmem>>, vector<12x1024xbf16>
    %cst_13 = arith.constant dense<0.000000e+00> : vector<8x1024xf32>
    %17 = tpu.matmul %15, %16, %cst_13 {dimension_numbers = #tpu.dot_dimension_numbers<[1], [0], [0], [1], [0, 0, 1, 1], [], []>} : vector<8x12xbf16>, vector<12x1024xbf16>, vector<8x1024xf32> -> vector<8x1024xf32>
    %18 = arith.addf %13, %17 : vector<8x1024xf32>
    %c0_14 = arith.constant 0 : index
    %c0_15 = arith.constant 0 : index
    %19 = vector.load %arg5[%c0_14, %c0_15] : memref<8x1xf32, #tpu.memory_space<vmem>>, vector<8x1xf32>
    %20 = vector.broadcast %19 : vector<8x1xf32> to vector<8x1024xf32>
    %21 = arith.addf %18, %20 : vector<8x1024xf32>
    %cst_16 = arith.constant 0.000000e+00 : f32
    %22 = vector.broadcast %cst_16 : f32 to vector<8x1024xf32>
    %23 = arith.maximumf %21, %22 : vector<8x1024xf32>
    %c0_17 = arith.constant 0 : index
    %c0_18 = arith.constant 0 : index
    %c0_19 = arith.constant 0 : index
    %24 = vector.load %arg6[%c0_17, %c0_18, %c0_19] : memref<1x8x1024xf32, #tpu.memory_space<vmem>>, vector<1x8x1024xf32>
    %25 = vector.shape_cast %24 : vector<1x8x1024xf32> to vector<8x1024xf32>
    %26 = vector.shape_cast %23 : vector<8x1024xf32> to vector<1x8x1024xf32>
    tpu.vector_store %arg6[%c0_17, %c0_18, %c0_19], %26 {strides = array<i32>} : memref<1x8x1024xf32, #tpu.memory_space<vmem>>, vector<1x8x1024xf32>,
    return
  }
  func.func @transform_0(%arg0: i32, %arg1: i32) -> (i32, i32, i32) {
    %c0_i32 = arith.constant 0 : i32
    %c0_i32_0 = arith.constant 0 : i32
    %c0_i32_1 = arith.constant 0 : i32
    return %arg0, %c0_i32, %c0_i32_0 : i32, i32, i32
  }
  func.func @transform_1(%arg0: i32, %arg1: i32) -> (i32, i32) {
    %c0_i32 = arith.constant 0 : i32
    %c0_i32_0 = arith.constant 0 : i32
    %c0_i32_1 = arith.constant 0 : i32
    return %c0_i32, %c0_i32_0 : i32, i32
  }
  func.func @transform_2(%arg0: i32, %arg1: i32) -> (i32, i32, i32) {
    %c0_i32 = arith.constant 0 : i32
    %c0_i32_0 = arith.constant 0 : i32
    %c0_i32_1 = arith.constant 0 : i32
    return %c0_i32, %arg1, %c0_i32_0 : i32, i32, i32
  }
  func.func @transform_3(%arg0: i32, %arg1: i32) -> (i32, i32) {
    %c0_i32 = arith.constant 0 : i32
    %c0_i32_0 = arith.constant 0 : i32
    return %arg1, %c0_i32 : i32, i32
  }
  func.func @transform_4(%arg0: i32, %arg1: i32) -> (i32, i32, i32) {
    %c0_i32 = arith.constant 0 : i32
    %c0_i32_0 = arith.constant 0 : i32
    return %arg0, %arg1, %c0_i32 : i32, i32, i32
  }
}

</mosaic_0001>

<llo_original>
// kernel: tile.2
$region0: #{tile.2}
  %s0 = inlined_call_operand.vmem [shape: bf16[8,4,32], index: 0, kind: input, shape index: {}]
  %s1 = inlined_call_operand.vmem [shape: bf16[8,128], index: 1, kind: output, shape index: {}]
  $region1: #{tile.2} parent=0
    #allocation0 [shape = 'u8[4096]{0}', space=vmem, size = 0x1000, scoped, tag = 'scoped mem for output reshape']
    #allocation1 [shape = 'u8[32768]{0}', space=vmem, size = 0x8000, scoped, tag = 'scoped mem for input reshape']
    %s3 = smul.u32 2, 2
    %s4 = sshllo.u32 0, %s3
    %s5 = smul.addr 2, 7
    %s6 = scalar_lea.vmem %s0, %s5
    %s7 = sshrl.u32 %s4, 1
    %s8 = sor.u32 %s4, %s7
    %s9 = sand.u32 %s8, 85
    %s10 = sshrl.u32 %s9, 1
    %s11 = sor.u32 %s9, %s10
    %s12 = sand.u32 51, %s11
    %s13 = sshrl.u32 %s12, 2
    %s14 = sor.u32 %s12, %s13
    %s15 = sand.u32 15, %s14
    %v16 = vld [vmem:[%s6] sm:%s15]
    %v17 = vunpack.c.l.bf16 %v16
    %v18 = vunpack.c.h.bf16 %v16
    %s19 = scalar_lea.vmem [#allocation1], 56
    %20 = vst [vmem:[%s19] sm:%s4] %v17
    %s21 = smul.addr 2, 6
    %s22 = scalar_lea.vmem %s0, %s21
    %s23 = sshrl.u32 %s4, 1
    %s24 = sor.u32 %s4, %s23
    %s25 = sand.u32 %s24, 85
    %s26 = sshrl.u32 %s25, 1
    %s27 = sor.u32 %s25, %s26
    %s28 = sand.u32 51, %s27
    %s29 = sshrl.u32 %s28, 2
    %s30 = sor.u32 %s28, %s29
    %s31 = sand.u32 15, %s30
    %v32 = vld [vmem:[%s22] sm:%s31]
    %v33 = vunpack.c.l.bf16 %v32
    %v34 = vunpack.c.h.bf16 %v32
    %s35 = scalar_lea.vmem [#allocation1], 48
    %36 = vst [vmem:[%s35] sm:%s4] %v33
    %s37 = smul.addr 2, 5
    %s38 = scalar_lea.vmem %s0, %s37
    %s39 = sshrl.u32 %s4, 1
    %s40 = sor.u32 %s4, %s39
    %s41 = sand.u32 %s40, 85
    %s42 = sshrl.u32 %s41, 1
    %s43 = sor.u32 %s41, %s42
    %s44 = sand.u32 51, %s43
    %s45 = sshrl.u32 %s44, 2
    %s46 = sor.u32 %s44, %s45
    %s47 = sand.u32 15, %s46
    %v48 = vld [vmem:[%s38] sm:%s47]
    %v49 = vunpack.c.l.bf16 %v48
    %v50 = vunpack.c.h.bf16 %v48
    %s51 = scalar_lea.vmem [#allocation1], 40
    %52 = vst [vmem:[%s51] sm:%s4] %v49
    %s53 = smul.addr 2, 4
    %s54 = scalar_lea.vmem %s0, %s53
    %s55 = sshrl.u32 %s4, 1
    %s56 = sor.u32 %s4, %s55
    %s57 = sand.u32 %s56, 85
    %s58 = sshrl.u32 %s57, 1
    %s59 = sor.u32 %s57, %s58
    %s60 = sand.u32 51, %s59
    %s61 = sshrl.u32 %s60, 2
    %s62 = sor.u32 %s60, %s61
    %s63 = sand.u32 15, %s62
    %v64 = vld [vmem:[%s54] sm:%s63]
    %v65 = vunpack.c.l.bf16 %v64
    %v66 = vunpack.c.h.bf16 %v64
    %s67 = scalar_lea.vmem [#allocation1], 32
    %68 = vst [vmem:[%s67] sm:%s4] %v65
    %s69 = smul.addr 2, 3
    %s70 = scalar_lea.vmem %s0, %s69
    %s71 = sshrl.u32 %s4, 1
    %s72 = sor.u32 %s4, %s71
    %s73 = sand.u32 %s72, 85
    %s74 = sshrl.u32 %s73, 1
    %s75 = sor.u32 %s73, %s74
    %s76 = sand.u32 51, %s75
    %s77 = sshrl.u32 %s76, 2
    %s78 = sor.u32 %s76, %s77
    %s79 = sand.u32 15, %s78
    %v80 = vld [vmem:[%s70] sm:%s79]
    %v81 = vunpack.c.l.bf16 %v80
    %v82 = vunpack.c.h.bf16 %v80
    %s83 = scalar_lea.vmem [#allocation1], 24
    %84 = vst [vmem:[%s83] sm:%s4] %v81
    %s85 = smul.addr 2, 2
    %s86 = scalar_lea.vmem %s0, %s85
    %s87 = sshrl.u32 %s4, 1
    %s88 = sor.u32 %s4, %s87
    %s89 = sand.u32 %s88, 85
    %s90 = sshrl.u32 %s89, 1
    %s91 = sor.u32 %s89, %s90
    %s92 = sand.u32 51, %s91
    %s93 = sshrl.u32 %s92, 2
    %s94 = sor.u32 %s92, %s93
    %s95 = sand.u32 15, %s94
    %v96 = vld [vmem:[%s86] sm:%s95]
    %v97 = vunpack.c.l.bf16 %v96
    %v98 = vunpack.c.h.bf16 %v96
    %s99 = scalar_lea.vmem [#allocation1], 16
    %100 = vst [vmem:[%s99] sm:%s4] %v97
    %s101 = scalar_lea.vmem %s0, 2
    %s102 = sshrl.u32 %s4, 1
    %s103 = sor.u32 %s4, %s102
    %s104 = sand.u32 %s103, 85
    %s105 = sshrl.u32 %s104, 1
    %s106 = sor.u32 %s104, %s105
    %s107 = sand.u32 51, %s106
    %s108 = sshrl.u32 %s107, 2
    %s109 = sor.u32 %s107, %s108
    %s110 = sand.u32 15, %s109
    %v111 = vld [vmem:[%s101] sm:%s110]
    %v112 = vunpack.c.l.bf16 %v111
    %v113 = vunpack.c.h.bf16 %v111
    %s114 = scalar_lea.vmem [#allocation1], 8
    %115 = vst [vmem:[%s114] sm:%s4] %v112
    %s116 = sshrl.u32 %s4, 1
    %s117 = sor.u32 %s4, %s116
    %s118 = sand.u32 %s117, 85
    %s119 = sshrl.u32 %s118, 1
    %s120 = sor.u32 %s118, %s119
    %s121 = sand.u32 51, %s120
    %s122 = sshrl.u32 %s121, 2
    %s123 = sor.u32 %s121, %s122
    %s124 = sand.u32 15, %s123
    %v125 = vld [vmem:[%s0] sm:%s124]
    %v126 = vunpack.c.l.bf16 %v125
    %v127 = vunpack.c.h.bf16 %v125
    %128 = vst [vmem:[#allocation1] sm:%s4] %v126
    %v129 = vld [vmem:[#allocation1] ss:$8 sm:$0xf]
    %v130 = vld [vmem:[#allocation1] ss:$8 sm:$0xf0]
    %vm131 = vcmask 1047556
    %v132 = vsel %vm131, %v130, %v129
    %vm133 = vcmask 261120
    %134 = vst.msk [vmem:[#allocation0] sm:$0xff] %vm133, %v132
    %s135 = scalar_lea.vmem [#allocation1], 3
    %v136 = vld [vmem:[%s135] ss:$8 sm:$0xf]
    %s137 = scalar_lea.vmem [#allocation1], 3
    %v138 = vld [vmem:[%s137] ss:$8 sm:$0xf0]
    %vm139 = vcmask 1047556
    %v140 = vsel %vm139, %v138, %v136
    %141 = vrot.lane.b32.xlu0 %v140, 96
    %v142 = vpop.permute.xlu0 %141
    %vm143 = vcmask 1048320
    %144 = vst.msk [vmem:[#allocation0] sm:$0xff] %vm143, %v142
    %s145 = scalar_lea.vmem [#allocation1], 2
    %v146 = vld [vmem:[%s145] ss:$8 sm:$0xf]
    %s147 = scalar_lea.vmem [#allocation1], 2
    %v148 = vld [vmem:[%s147] ss:$8 sm:$0xf0]
    %vm149 = vcmask 1047556
    %v150 = vsel %vm149, %v148, %v146
    %151 = vrot.lane.b32.xlu0 %v150, 64
    %v152 = vpop.permute.xlu0 %151
    %vm153 = vcmask 785920
    %154 = vst.msk [vmem:[#allocation0] sm:$0xff] %vm153, %v152
    %s155 = scalar_lea.vmem [#allocation1], 1
    %v156 = vld [vmem:[%s155] ss:$8 sm:$0xf]
    %s157 = scalar_lea.vmem [#allocation1], 1
    %v158 = vld [vmem:[%s157] ss:$8 sm:$0xf0]
    %vm159 = vcmask 1047556
    %v160 = vsel %vm159, %v158, %v156
    %161 = vrot.lane.b32.xlu0 %v160, 32
    %v162 = vpop.permute.xlu0 %161
    %vm163 = vcmask 523520
    %164 = vst.msk [vmem:[#allocation0] sm:$0xff] %vm163, %v162
    %s166 = smul.u32 4, 2
    %s167 = sshllo.u32 0, %s166
    %s168 = sshrl.u32 %s166, 1
    %v169 = vld [vmem:[#allocation0] sm:%s167]
    %v170 = vpack.c.bf16 0.0, %v169
    %s171 = sshllo.u32 0, %s168
    %172 = vst [vmem:[%s1] sm:%s171] %v170

// kernel: up_conv_forward.1
$region0: #{up_conv_forward.1}
  #allocation0 [shape = 'u32[]', space=smem, size = 0x4, offset = 0x4, fixed_abs, tag = 'smem constant byte address 0x4 - core index']
  #allocation1 [shape = 'u32[144,128]{1,0:T(1,128)}', space=vmem, size = 0x12000, scoped, tag = 'internal scratch']
  #allocation2 [shape = 'bf16[12,1088]{1,0:T(8,128)(2,1)}', space=vmem, size = 0x9000, scoped, tag = 'scratch operand']
  %s0 = inlined_call_operand.vmem [shape: bf16[2,32,8], index: 0, kind: input, shape index: {}]
  %s1 = inlined_call_operand.vmem [shape: bf16[8,384], index: 1, kind: input, shape index: {}]
  %s2 = inlined_call_operand.vmem [shape: bf16[3,8,12], index: 2, kind: input, shape index: {}]
  %s3 = inlined_call_operand.vmem [shape: f32[8,1], index: 3, kind: input, shape index: {}]
  %s4 = inlined_call_operand.vmem [shape: f32[2,8,1024], index: 4, kind: output, shape index: {}]
  %s5 = sld [smem:[#allocation0]]
  $region53: #{up_conv_forward.1} parent=0
    _
  %s7 = ssub.s32 1, %s5
  %s8 = scalar_select 0, %s7, %s5
  loop: start=0, step=1, limit=4
  $region2: #{up_conv_forward.1} parent=0 // loop_pre_header
    _
  $region3: #{up_conv_forward.1} parent=0 // loop_header
    %s10 = sphi 0, %s14
    %p11 = scmp.ge.s32.totalorder %s10, 4
    %s17 = sphi 0, %s29
    %s18 = sphi 0, %s25
    %s19 = sphi 0, %s17
    %s20 = sphi 0, %s18
    %s21 = sphi 0, %s19
    %s22 = sphi 0, %s20
    %s32 = sphi 0, %s34
    %s35 = sphi 0, %s32
    %s36 = sphi 0, %s35
    %s52 = sphi 0, %s36
    %s56 = sphi 0, %s56
    %s58 = sphi 0, %s56
    %s59 = sphi 0, %s58
    %s73 = sphi 0, %s59
    %s79 = sphi 0, %s81
    %s82 = sphi 0, %s79
    %s83 = sphi 0, %s82
    %s99 = sphi 0, %s83
    %s105 = sphi 0, %s107
    %s108 = sphi 0, %s105
    %s109 = sphi 0, %s108
    %s125 = sphi 0, %s109
    %s133 = sphi 0, %s135
    %s136 = sphi 0, %s133
    %s137 = sphi 0, %s136
    %s153 = sphi 0, %s137
  $region4: #{up_conv_forward.1} parent=0 // loop_header_branch
    %13 = sbr.rel (%p11) target = $region8
  $region5: #{up_conv_forward.1} parent=0 // loop_body
    %s15 = ssub.s32 %s10, 1
    %s16 = ssub.s32 %s10, 2
    %s23 = sadd.s32 1, %s18
    %p24 = scmp.ge.s32.totalorder %s23, 1
    %s25 = scalar_select %p24, 0, %s23
    %s26 = sadd.s32 1, %s17
    %s27 = scalar_select %p24, %s26, %s17
    %p28 = scmp.ge.s32.totalorder %s27, 2
    %s29 = scalar_select %p28, 0, %s27
    %s30 = ssub.s32 %s17, %s29
    %p31 = scmp.eq.s32.totalorder %s30, 0
    %s33 = sadd.s32 %s32, 1
    %s34 = scalar_select %p31, %s32, %s33
    %p37 = pneg %p31
    %p38 = scmp.eq.s32.totalorder %s10, 1
    %p39 = por %p37, %p38
    %p40 = scmp.ne.s32.totalorder %s32, %s35
    %p41 = scmp.eq.s32.totalorder %s10, 0
    %p42 = por %p40, %p41
    %p43 = scmp.ne.s32.totalorder %s32, %s35
    %p44 = scmp.eq.s32.totalorder %s15, 1
    %p45 = por %p43, %p44
    %p46 = scmp.ne.s32.totalorder %s35, %s36
    %p47 = scmp.eq.s32.totalorder %s15, 0
    %p48 = por %p46, %p47
    %p49 = scmp.ne.s32.totalorder %s35, %s36
    %p50 = scmp.eq.s32.totalorder %s16, 1
    %p51 = por %p49, %p50
    %p53 = scmp.ne.s32.totalorder %s36, %s52
    %p54 = scmp.eq.s32.totalorder %s16, 0
    %p55 = por %p53, %p54
    %s57 = sadd.s32 %s56, 1
    %p60 = scmp.eq.s32.totalorder %s10, 1
    %p61 = scmp.ne.s32.totalorder %s56, %s58
    %p62 = scmp.eq.s32.totalorder %s10, 0
    %p63 = por %p61, %p62
    %p64 = scmp.ne.s32.totalorder %s56, %s58
    %p65 = scmp.eq.s32.totalorder %s15, 1
    %p66 = por %p64, %p65
    %p67 = scmp.ne.s32.totalorder %s58, %s59
    %p68 = scmp.eq.s32.totalorder %s15, 0
    %p69 = por %p67, %p68
    %p70 = scmp.ne.s32.totalorder %s58, %s59
    %p71 = scmp.eq.s32.totalorder %s16, 1
    %p72 = por %p70, %p71
    %p74 = scmp.ne.s32.totalorder %s59, %s73
    %p75 = scmp.eq.s32.totalorder %s16, 0
    %p76 = por %p74, %p75
    %s77 = ssub.s32 %s18, %s25
    %p78 = scmp.eq.s32.totalorder %s77, 0
    %s80 = sadd.s32 %s79, 1
    %s81 = scalar_select %p78, %s79, %s80
    %p84 = pneg %p78
    %p85 = scmp.eq.s32.totalorder %s10, 1
    %p86 = por %p84, %p85
    %p87 = scmp.ne.s32.totalorder %s79, %s82
    %p88 = scmp.eq.s32.totalorder %s10, 0
    %p89 = por %p87, %p88
    %p90 = scmp.ne.s32.totalorder %s79, %s82
    %p91 = scmp.eq.s32.totalorder %s15, 1
    %p92 = por %p90, %p91
    %p93 = scmp.ne.s32.totalorder %s82, %s83
    %p94 = scmp.eq.s32.totalorder %s15, 0
    %p95 = por %p93, %p94
    %p96 = scmp.ne.s32.totalorder %s82, %s83
    %p97 = scmp.eq.s32.totalorder %s16, 1
    %p98 = por %p96, %p97
    %p100 = scmp.ne.s32.totalorder %s83, %s99
    %p101 = scmp.eq.s32.totalorder %s16, 0
    %p102 = por %p100, %p101
    %s103 = ssub.s32 %s18, %s25
    %p104 = scmp.eq.s32.totalorder %s103, 0
    %s106 = sadd.s32 %s105, 1
    %s107 = scalar_select %p104, %s105, %s106
    %p110 = pneg %p104
    %p111 = scmp.eq.s32.totalorder %s10, 1
    %p112 = por %p110, %p111
    %p113 = scmp.ne.s32.totalorder %s105, %s108
    %p114 = scmp.eq.s32.totalorder %s10, 0
    %p115 = por %p113, %p114
    %p116 = scmp.ne.s32.totalorder %s105, %s108
    %p117 = scmp.eq.s32.totalorder %s15, 1
    %p118 = por %p116, %p117
    %p119 = scmp.ne.s32.totalorder %s108, %s109
    %p120 = scmp.eq.s32.totalorder %s15, 0
    %p121 = por %p119, %p120
    %p122 = scmp.ne.s32.totalorder %s108, %s109
    %p123 = scmp.eq.s32.totalorder %s16, 1
    %p124 = por %p122, %p123
    %p126 = scmp.ne.s32.totalorder %s109, %s125
    %p127 = scmp.eq.s32.totalorder %s16, 0
    %p128 = por %p126, %p127
    %s129 = ssub.s32 %s17, %s29
    %s130 = ssub.s32 %s18, %s25
    %s131 = sor.u32 %s129, %s130
    %p132 = scmp.eq.s32.totalorder %s131, 0
    %s134 = sadd.s32 %s133, 1
    %s135 = scalar_select %p132, %s133, %s134
    %p138 = pneg %p132
    %p139 = scmp.eq.s32.totalorder %s10, 1
    %p140 = por %p138, %p139
    %p141 = scmp.ne.s32.totalorder %s133, %s136
    %p142 = scmp.eq.s32.totalorder %s10, 0
    %p143 = por %p141, %p142
    %p144 = scmp.ne.s32.totalorder %s133, %s136
    %p145 = scmp.eq.s32.totalorder %s15, 1
    %p146 = por %p144, %p145
    %p147 = scmp.ne.s32.totalorder %s136, %s137
    %p148 = scmp.eq.s32.totalorder %s15, 0
    %p149 = por %p147, %p148
    %p150 = scmp.ne.s32.totalorder %s136, %s137
    %p151 = scmp.eq.s32.totalorder %s16, 1
    %p152 = por %p150, %p151
    %p154 = scmp.ne.s32.totalorder %s137, %s153
    %p155 = scmp.eq.s32.totalorder %s16, 0
    %p156 = por %p154, %p155
    %p157 = scmp.le.s32.totalorder 1, %s10
    %p158 = scmp.lt.s32.totalorder %s10, 3
    %p159 = pnand %p157, %p158
    %p160 = pneg %p159
    // Predicated region
    $region9: #{up_conv_forward.1} parent=5 // pred_check
      _
    $region10: #{up_conv_forward.1} parent=5 // pred_check_branch
      %162 = sbr.rel (%p159) target = $region12
    $region11: #{up_conv_forward.1} parent=5 // pred_region
      %s163 = ssub.s32 %s10, 1
      // Predicated region
      $region13: #{up_conv_forward.1} parent=11 // pred_check
        %p164 = pneg %p69
      $region14: #{up_conv_forward.1} parent=11 // pred_check_branch
        %166 = sbr.rel (%p164) target = $region16
      $region15: #{up_conv_forward.1} parent=11 // pred_region
        _
      $region16: #{up_conv_forward.1} parent=11 // pred_fallthru
        _
      // Predicated region
      $region17: #{up_conv_forward.1} parent=11 // pred_check
        %p167 = pneg %p95
      $region18: #{up_conv_forward.1} parent=11 // pred_check_branch
        %169 = sbr.rel (%p167) target = $region20
      $region19: #{up_conv_forward.1} parent=11 // pred_region
        %p170 = scmp.lt.s32.totalorder %s20, 0
        %s171 = scalar_select %p170, %s20, 0
        %s172 = smul.addr %s171, 4
        %s173 = scalar_lea.vmem %s2, %s172
      $region20: #{up_conv_forward.1} parent=11 // pred_fallthru
        _
      // Predicated region
      $region21: #{up_conv_forward.1} parent=11 // pred_check
        %p174 = pneg %p121
      $region22: #{up_conv_forward.1} parent=11 // pred_check_branch
        %176 = sbr.rel (%p174) target = $region24
      $region23: #{up_conv_forward.1} parent=11 // pred_region
        %p177 = scmp.lt.s32.totalorder %s20, 0
        %s178 = scalar_select %p177, %s20, 0
        %s179 = smul.addr %s178, 8
        %s180 = scalar_lea.vmem %s3, %s179
      $region24: #{up_conv_forward.1} parent=11 // pred_fallthru
        _
    $region12: #{up_conv_forward.1} parent=5 // pred_fallthru
      _
    %p181 = scmp.lt.s32.totalorder %s10, 2
    // Predicated region
    $region25: #{up_conv_forward.1} parent=5 // pred_check
      %p182 = pneg %p181
    $region26: #{up_conv_forward.1} parent=5 // pred_check_branch
      %184 = sbr.rel (%p182) target = $region28
    $region27: #{up_conv_forward.1} parent=5 // pred_region
      // Predicated region
      $region29: #{up_conv_forward.1} parent=27 // pred_check
        %p185 = pneg %p42
      $region30: #{up_conv_forward.1} parent=27 // pred_check_branch
        %187 = sbr.rel (%p185) target = $region32
      $region31: #{up_conv_forward.1} parent=27 // pred_region
        %p188 = scmp.lt.s32.totalorder %s17, 1
        %s189 = scalar_select %p188, %s17, 1
        %s190 = smul.addr %s189, 4
        %s191 = smul.addr %s190, 4
        %s192 = scalar_lea.vmem %s0, %s191
      $region32: #{up_conv_forward.1} parent=27 // pred_fallthru
        _
    $region28: #{up_conv_forward.1} parent=5 // pred_fallthru
      _
    %p193 = scmp.le.s32.totalorder 1, %s10
    %p194 = scmp.lt.s32.totalorder %s10, 3
    %p195 = pnand %p193, %p194
    %p196 = pneg %p195
    // Predicated region
    $region33: #{up_conv_forward.1} parent=5 // pred_check
      _
    $region34: #{up_conv_forward.1} parent=5 // pred_check_branch
      %198 = sbr.rel (%p195) target = $region36
    $region35: #{up_conv_forward.1} parent=5 // pred_region
      %s199 = ssub.s32 %s10, 1
      %p200 = scmp.lt.s32.totalorder %s19, 1
      %s201 = scalar_select %p200, %s19, 1
      %s202 = smul.addr %s201, 4
      %s203 = smul.addr %s202, 4
      %s204 = scalar_lea.vmem %s0, %s203
      %p205 = pneg %p48
      %p206 = pneg %p45
      %p207 = pneg %p69
      %p208 = pneg %p66
      %p209 = scmp.lt.s32.totalorder %s20, 0
      %s210 = scalar_select %p209, %s20, 0
      %s211 = smul.addr %s210, 4
      %s212 = scalar_lea.vmem %s2, %s211
      %p213 = pneg %p95
      %p214 = pneg %p92
      %p215 = scmp.lt.s32.totalorder %s20, 0
      %s216 = scalar_select %p215, %s20, 0
      %s217 = smul.addr %s216, 8
      %s218 = scalar_lea.vmem %s3, %s217
      %p219 = pneg %p121
      %p220 = pneg %p118
      %p221 = pneg %p149
      %p222 = pneg %p146
      %p223 = scmp.lt.s32.totalorder %s19, 1
      %s224 = scalar_select %p223, %s19, 1
      %p225 = scmp.lt.s32.totalorder %s20, 0
      %s226 = scalar_select %p225, %s20, 0
      %s227 = smul.addr %s226, 8
      %s228 = smul.addr %s224, 8
      %s229 = sadd.s32 %s227, %s228
      %s230 = smul.addr %s229, 8
      %s231 = scalar_lea.vmem %s4, %s230
      %p232 = scmp.lt.s32.totalorder %s19, 1
      %s233 = scalar_select %p232, %s19, 1
      %s234 = smul.addr %s233, 4
      %s235 = smul.addr %s234, 4
      %s236 = scalar_lea.vmem %s0, %s235
      %p237 = scmp.lt.s32.totalorder %s20, 0
      %s238 = scalar_select %p237, %s20, 0
      %s239 = smul.addr %s238, 4
      %s240 = scalar_lea.vmem %s2, %s239
      %p241 = scmp.lt.s32.totalorder %s20, 0
      %s242 = scalar_select %p241, %s20, 0
      %s243 = smul.addr %s242, 8
      %s244 = scalar_lea.vmem %s3, %s243
      %p245 = scmp.lt.s32.totalorder %s19, 1
      %s246 = scalar_select %p245, %s19, 1
      %p247 = scmp.lt.s32.totalorder %s20, 0
      %s248 = scalar_select %p247, %s20, 0
      %s249 = smul.addr %s248, 8
      %s250 = smul.addr %s246, 8
      %s251 = sadd.s32 %s249, %s250
      %s252 = smul.addr %s251, 8
      %s253 = scalar_lea.vmem %s4, %s252
      %p255 = scmp.eq.s32.totalorder %s20, 0
      // Predicated region
      $region37: #{up_conv_forward.1} parent=35 // pred_check
        %p256 = pneg %p255
      $region38: #{up_conv_forward.1} parent=35 // pred_check_branch
        %258 = sbr.rel (%p256) target = $region40
      $region39: #{up_conv_forward.1} parent=35 // pred_region
        %v259 = vld [vmem:[%s236] sm:$0xf]
        %v260 = vld [vmem:[%s236 + $0x4] sm:$0xf]
        %v261 = vld [vmem:[%s236 + $0x8] sm:$0xf]
        %v262 = vld [vmem:[%s236 + $0xc] sm:$0xf]
        %v263 = vld [vmem:[%s1] sm:$0xff]
        %v264 = vld [vmem:[%s1 + $0x8] sm:$0xf]
        %v269 = vunpack.c.l.b16 %v259
        %v270 = vunpack.c.l.b16 %v260
        %v271 = vunpack.c.l.b16 %v261
        %v272 = vunpack.c.l.b16 %v262
        %v273 = vpack.c.b16 %v270, %v269
        %v274 = vpack.c.b16 %v272, %v271
        %v277 = vunpack.c.l.b16 %v263
        %v278 = vunpack.c.h.b16 %v263
        %v279 = vunpack.c.l.b16 %v264
        %v280 = vpack.c.b16 %v277, %v277
        %v281 = vpack.c.b16 %v278, %v278
        %v282 = vpack.c.b16 %v279, %v279
        %vm283 = vcmask 64512
        %v285 = vsel %vm283, %v273, 0
        %v288 = vsel %vm283, %v274, 0
        %vm290 = vcmask 1043456
        %v292 = vsel %vm290, %v280, 0
        %v295 = vsel %vm290, %v281, 0
        %v298 = vsel %vm290, %v282, 0
        %300 = vmatprep.subr.bf16.mxu0 %v295
        %301 = vmatpush1.bf16.msra.mxu0 %v292
        %302 = vmatprep.subr.bf16.mxu0 0
        %303 = vmatpush1.bf16.msra.mxu0 0
        %304 = vmatprep.subr.bf16.mxu0 0
        %305 = vmatpush1.bf16.msra.mxu0 0
        %306 = vmatprep.subr.bf16.mxu0 0
        %307 = vmatpush1.bf16.msra.mxu0 0
        %308 = vmatprep.subr.bf16.mxu0 0
        %309 = vmatpush1.bf16.msra.mxu0 0
        %310 = vmatprep.subr.bf16.mxu0 0
        %311 = vmatpush1.bf16.msra.mxu0 0
        %312 = vmatprep.subr.bf16.mxu0 0
        %313 = vmatpush1.bf16.msra.mxu0 0
        %314 = vmatprep.subr.bf16.mxu0 0
        %315 = vmatpush1.bf16.msra.mxu0 0
        %316 = vmatprep.subr.bf16.mxu0 0
        %317 = vmatpush1.bf16.msra.mxu0 0
        %318 = vmatprep.subr.bf16.mxu0 0
        %319 = vmatpush1.bf16.msra.mxu0 0
        %320 = vmatprep.subr.bf16.mxu0 0
        %321 = vmatpush1.bf16.msra.mxu0 0
        %322 = vmatprep.subr.bf16.mxu0 0
        %323 = vmatpush1.bf16.msra.mxu0 0
        %324 = vmatprep.subr.bf16.mxu0 0
        %325 = vmatpush1.bf16.msra.mxu0 0
        %326 = vmatprep.subr.bf16.mxu0 0
        %327 = vmatpush1.bf16.msra.mxu0 0
        %328 = vmatprep.subr.bf16.mxu0 0
        %329 = vmatpush1.bf16.msra.mxu0 0
        %330 = vmatprep.subr.bf16.mxu0 0
        %331 = vmatpush1.bf16.msra.mxu0 0
        %332 = vmatprep.mubr.bf16.mxu0 0
        %333 = vmatmul.mubr.bf16.gmra.mrb[0].mxu0 %v285
        %v334 = vpop.f32.mrb[0].mxu0
        %v335 = vadd.f32 0.0, %v334
        %v336 = vpop.f32.mrb[0].mxu0
        %v337 = vadd.f32 0.0, %v336
        %v338 = vpop.f32.mrb[0].mxu0
        %v339 = vadd.f32 0.0, %v338
        %v340 = vpop.f32.mrb[0].mxu0
        %v341 = vadd.f32 0.0, %v340
        %342 = vmatprep.mubr.bf16.mxu0 0
        %343 = vmatmul.mubr.bf16.gmra.mrb[0].mxu0 %v288
        %v344 = vpop.f32.mrb[0].mxu0
        %v345 = vadd.f32 0.0, %v344
        %v346 = vpop.f32.mrb[0].mxu0
        %v347 = vadd.f32 0.0, %v346
        %v348 = vpop.f32.mrb[0].mxu0
        %v349 = vadd.f32 0.0, %v348
        %v350 = vpop.f32.mrb[0].mxu0
        %v351 = vadd.f32 0.0, %v350
        %352 = vdwg.mxu0
        %353 = vmatprep.subr.bf16.mxu0 0
        %354 = vmatpush1.bf16.msra.mxu0 %v298
        %355 = vmatprep.subr.bf16.mxu0 0
        %356 = vmatpush1.bf16.msra.mxu0 0
        %357 = vmatprep.subr.bf16.mxu0 0
        %358 = vmatpush1.bf16.msra.mxu0 0
        %359 = vmatprep.subr.bf16.mxu0 0
        %360 = vmatpush1.bf16.msra.mxu0 0
        %361 = vmatprep.subr.bf16.mxu0 0
        %362 = vmatpush1.bf16.msra.mxu0 0
        %363 = vmatprep.subr.bf16.mxu0 0
        %364 = vmatpush1.bf16.msra.mxu0 0
        %365 = vmatprep.subr.bf16.mxu0 0
        %366 = vmatpush1.bf16.msra.mxu0 0
        %367 = vmatprep.subr.bf16.mxu0 0
        %368 = vmatpush1.bf16.msra.mxu0 0
        %369 = vmatprep.subr.bf16.mxu0 0
        %370 = vmatpush1.bf16.msra.mxu0 0
        %371 = vmatprep.subr.bf16.mxu0 0
        %372 = vmatpush1.bf16.msra.mxu0 0
        %373 = vmatprep.subr.bf16.mxu0 0
        %374 = vmatpush1.bf16.msra.mxu0 0
        %375 = vmatprep.subr.bf16.mxu0 0
        %376 = vmatpush1.bf16.msra.mxu0 0
        %377 = vmatprep.subr.bf16.mxu0 0
        %378 = vmatpush1.bf16.msra.mxu0 0
        %379 = vmatprep.subr.bf16.mxu0 0
        %380 = vmatpush1.bf16.msra.mxu0 0
        %381 = vmatprep.subr.bf16.mxu0 0
        %382 = vmatpush1.bf16.msra.mxu0 0
        %383 = vmatprep.subr.bf16.mxu0 0
        %384 = vmatpush1.bf16.msra.mxu0 0
        %385 = vmatprep.mubr.bf16.mxu0 0
        %386 = vmatmul.mubr.bf16.gmra.mrb[0].mxu0 %v285
        %v387 = vpop.f32.mrb[0].mxu0
        %v388 = vadd.f32 0.0, %v387
        %v389 = vpop.f32.mrb[0].mxu0
        %v390 = vpop.f32.mrb[0].mxu0
        %v391 = vadd.f32 0.0, %v390
        %v392 = vpop.f32.mrb[0].mxu0
        %393 = vmatprep.mubr.bf16.mxu0 0
        %394 = vmatmul.mubr.bf16.gmra.mrb[0].mxu0 %v288
        %v395 = vpop.f32.mrb[0].mxu0
        %v396 = vadd.f32 0.0, %v395
        %v397 = vpop.f32.mrb[0].mxu0
        %v398 = vpop.f32.mrb[0].mxu0
        %v399 = vadd.f32 0.0, %v398
        %v400 = vpop.f32.mrb[0].mxu0
        %401 = vdwg.mxu0
        %vm402 = vcmask 257024
        %403 = vst.msk [vmem:[#allocation2] sm:$0xf] %vm402, 0
        %vm404 = vcmask 254976
        %405 = vst.msk [vmem:[#allocation2 + $0x24] sm:$0x3] %vm404, 0
        %vm406 = vcmask 519424
        %407 = vst.msk [vmem:[#allocation2 + $0x20] sm:$0xf] %vm406, 0
        %vm408 = vcmask 517376
        %409 = vst.msk [vmem:[#allocation2 + $0x44] sm:$0x3] %vm408, 0
        %v414 = vcombine.low %v335, %v339
        %v415 = vcombine.high %v335, %v339
        %v416 = vcombine.low %v345, %v349
        %v417 = vcombine.high %v345, %v349
        %v419 = vunpack.c.l.s4 1966171168
        %v420 = vunpack.c.0.s8 %v419
        %v421 = vlaneseq
        %v422 = vshrl.u32 %v421, 7
        %v423 = vsub.s32 %v420, %v422
        %v424 = vrot.slane %v414, %v423
        %v426 = vunpack.c.l.s4 1966171168
        %v427 = vunpack.c.0.s8 %v426
        %v428 = vlaneseq
        %v429 = vshrl.u32 %v428, 7
        %v430 = vsub.s32 %v427, %v429
        %v431 = vrot.slane %v415, %v430
        %v433 = vunpack.c.l.s4 1966171168
        %v434 = vunpack.c.0.s8 %v433
        %v435 = vlaneseq
        %v436 = vshrl.u32 %v435, 7
        %v437 = vsub.s32 %v434, %v436
        %v438 = vrot.slane %v416, %v437
        %v440 = vunpack.c.l.s4 1966171168
        %v441 = vunpack.c.0.s8 %v440
        %v442 = vlaneseq
        %v443 = vshrl.u32 %v442, 7
        %v444 = vsub.s32 %v441, %v443
        %v445 = vrot.slane %v417, %v444
        %v446 = vcombine.low %v424, %v438
        %v447 = vcombine.high %v424, %v438
        %v448 = vcombine.low %v431, %v445
        %v449 = vcombine.high %v431, %v445
        %v451 = vunpack.c.l.s4 1966171168
        %v452 = vunpack.c.0.s8 %v451
        %v453 = vlaneseq
        %v454 = vshrl.u32 %v453, 7
        %v455 = vsub.s32 %v452, %v454
        %v456 = vrot.slane %v446, %v455
        %v458 = vunpack.c.l.s4 1966171168
        %v459 = vunpack.c.0.s8 %v458
        %v460 = vlaneseq
        %v461 = vshrl.u32 %v460, 7
        %v462 = vsub.s32 %v459, %v461
        %v463 = vrot.slane %v448, %v462
        %v465 = vunpack.c.l.s4 1966171168
        %v466 = vunpack.c.0.s8 %v465
        %v467 = vlaneseq
        %v468 = vshrl.u32 %v467, 7
        %v469 = vsub.s32 %v466, %v468
        %v470 = vrot.slane %v447, %v469
        %v472 = vunpack.c.l.s4 1966171168
        %v473 = vunpack.c.0.s8 %v472
        %v474 = vlaneseq
        %v475 = vshrl.u32 %v474, 7
        %v476 = vsub.s32 %v473, %v475
        %v477 = vrot.slane %v449, %v476
        %v478 = vcombine.high %v456, %v456
        %v479 = vcombine.high %v463, %v463
        %v480 = vcombine.high %v470, %v470
        %v481 = vcombine.high %v477, %v477
        %v490 = vpack.c.bf16 %v456, %v456
        %v491 = vpack.c.bf16 %v470, %v470
        %v492 = vpack.c.bf16 %v478, %v478
        %v493 = vpack.c.bf16 %v480, %v480
        %v494 = vpack.c.bf16 %v463, %v463
        %v495 = vpack.c.bf16 %v477, %v477
        %v496 = vpack.c.bf16 %v479, %v479
        %v497 = vpack.c.bf16 %v481, %v481
        %v506 = vunpack.c.l.b16 %v490
        %v507 = vunpack.c.l.b16 %v491
        %v508 = vunpack.c.l.b16 %v492
        %v509 = vunpack.c.l.b16 %v493
        %v510 = vunpack.c.l.b16 %v494
        %v511 = vunpack.c.l.b16 %v495
        %v512 = vunpack.c.l.b16 %v496
        %v513 = vunpack.c.l.b16 %v497
        %v514 = vpack.c.b16 %v507, %v506
        %v515 = vpack.c.b16 %v509, %v508
        %v516 = vpack.c.b16 %v511, %v510
        %v517 = vpack.c.b16 %v513, %v512
        %518 = vrot.lane.b32.xlu0 %v514, 32
        %v519 = vpop.permute.xlu0 %518
        %520 = vrot.lane.b32.xlu0 %v515, 32
        %v521 = vpop.permute.xlu0 %520
        %522 = vrot.lane.b32.xlu0 %v516, 32
        %v523 = vpop.permute.xlu0 %522
        %524 = vrot.lane.b32.xlu0 %v517, 32
        %v525 = vpop.permute.xlu0 %524
        %v526 = vrot.slane %v519, 4
        %v527 = vrot.slane %v521, 4
        %v528 = vrot.slane %v523, 4
        %v529 = vrot.slane %v525, 4
        %vm530 = vcmask 261120
        %v531 = vsel %vm530, %v526, %v519
        %vm532 = vcmask 1043456
        %v533 = vsel %vm532, %v526, %v527
        %v534 = vsel %vm530, %v533, %v521
        %v535 = vsel %vm532, %v527, %v528
        %v536 = vsel %vm530, %v535, %v523
        %v537 = vsel %vm532, %v528, %v529
        %v538 = vsel %vm530, %v537, %v525
        %vm544 = vcmask 1041664
        %vm545 = vcmask 1045508
        %vm546 = vmor %vm545, %vm544
        %547 = vst.msk [vmem:[#allocation2] sm:$0x33] %vm546, %v531
        %548 = vst [vmem:[#allocation2 + $0x8] sm:$0x33] %v534
        %549 = vst [vmem:[#allocation2 + $0x10] sm:$0x33] %v536
        %550 = vst [vmem:[#allocation2 + $0x18] sm:$0x33] %v538
        %551 = vst.msk [vmem:[#allocation2 + $0x20] sm:$0x3] %vm404, %v529
        %v556 = vcombine.low %v337, %v341
        %v557 = vcombine.high %v337, %v341
        %v558 = vcombine.low %v347, %v351
        %v559 = vcombine.high %v347, %v351
        %v561 = vunpack.c.l.s4 1966171168
        %v562 = vunpack.c.0.s8 %v561
        %v563 = vlaneseq
        %v564 = vshrl.u32 %v563, 7
        %v565 = vsub.s32 %v562, %v564
        %v566 = vrot.slane %v556, %v565
        %v568 = vunpack.c.l.s4 1966171168
        %v569 = vunpack.c.0.s8 %v568
        %v570 = vlaneseq
        %v571 = vshrl.u32 %v570, 7
        %v572 = vsub.s32 %v569, %v571
        %v573 = vrot.slane %v557, %v572
        %v575 = vunpack.c.l.s4 1966171168
        %v576 = vunpack.c.0.s8 %v575
        %v577 = vlaneseq
        %v578 = vshrl.u32 %v577, 7
        %v579 = vsub.s32 %v576, %v578
        %v580 = vrot.slane %v558, %v579
        %v582 = vunpack.c.l.s4 1966171168
        %v583 = vunpack.c.0.s8 %v582
        %v584 = vlaneseq
        %v585 = vshrl.u32 %v584, 7
        %v586 = vsub.s32 %v583, %v585
        %v587 = vrot.slane %v559, %v586
        %v588 = vcombine.low %v566, %v580
        %v589 = vcombine.high %v566, %v580
        %v590 = vcombine.low %v573, %v587
        %v591 = vcombine.high %v573, %v587
        %v593 = vunpack.c.l.s4 1966171168
        %v594 = vunpack.c.0.s8 %v593
        %v595 = vlaneseq
        %v596 = vshrl.u32 %v595, 7
        %v597 = vsub.s32 %v594, %v596
        %v598 = vrot.slane %v588, %v597
        %v600 = vunpack.c.l.s4 1966171168
        %v601 = vunpack.c.0.s8 %v600
        %v602 = vlaneseq
        %v603 = vshrl.u32 %v602, 7
        %v604 = vsub.s32 %v601, %v603
        %v605 = vrot.slane %v590, %v604
        %v607 = vunpack.c.l.s4 1966171168
        %v608 = vunpack.c.0.s8 %v607
        %v609 = vlaneseq
        %v610 = vshrl.u32 %v609, 7
        %v611 = vsub.s32 %v608, %v610
        %v612 = vrot.slane %v589, %v611
        %v614 = vunpack.c.l.s4 1966171168
        %v615 = vunpack.c.0.s8 %v614
        %v616 = vlaneseq
        %v617 = vshrl.u32 %v616, 7
        %v618 = vsub.s32 %v615, %v617
        %v619 = vrot.slane %v591, %v618
        %v620 = vcombine.high %v598, %v598
        %v621 = vcombine.high %v605, %v605
        %v622 = vcombine.high %v612, %v612
        %v623 = vcombine.high %v619, %v619
        %v632 = vpack.c.bf16 %v598, %v598
        %v633 = vpack.c.bf16 %v612, %v612
        %v634 = vpack.c.bf16 %v620, %v620
        %v635 = vpack.c.bf16 %v622, %v622
        %v636 = vpack.c.bf16 %v605, %v605
        %v637 = vpack.c.bf16 %v619, %v619
        %v638 = vpack.c.bf16 %v621, %v621
        %v639 = vpack.c.bf16 %v623, %v623
        %v648 = vunpack.c.l.b16 %v632
        %v649 = vunpack.c.l.b16 %v633
        %v650 = vunpack.c.l.b16 %v634
        %v651 = vunpack.c.l.b16 %v635
        %v652 = vunpack.c.l.b16 %v636
        %v653 = vunpack.c.l.b16 %v637
        %v654 = vunpack.c.l.b16 %v638
        %v655 = vunpack.c.l.b16 %v639
        %v656 = vpack.c.b16 %v649, %v648
        %v657 = vpack.c.b16 %v651, %v650
        %v658 = vpack.c.b16 %v653, %v652
        %v659 = vpack.c.b16 %v655, %v654
        %v660 = vrot.slane %v656, 6
        %v661 = vrot.slane %v657, 6
        %v662 = vrot.slane %v658, 6
        %v663 = vrot.slane %v659, 6
        %664 = vrot.lane.b32.xlu0 %v660, 32
        %v665 = vpop.permute.xlu0 %664
        %666 = vrot.lane.b32.xlu0 %v661, 32
        %v667 = vpop.permute.xlu0 %666
        %668 = vrot.lane.b32.xlu0 %v662, 32
        %v669 = vpop.permute.xlu0 %668
        %670 = vrot.lane.b32.xlu0 %v663, 32
        %v671 = vpop.permute.xlu0 %670
        %v672 = vrot.slane %v665, 4
        %v673 = vrot.slane %v667, 4
        %v674 = vrot.slane %v669, 4
        %v675 = vrot.slane %v671, 4
        %v676 = vsel %vm530, %v672, %v665
        %v677 = vsel %vm532, %v672, %v673
        %v678 = vsel %vm530, %v677, %v667
        %v679 = vsel %vm532, %v673, %v674
        %v680 = vsel %vm530, %v679, %v669
        %v681 = vsel %vm532, %v674, %v675
        %v682 = vsel %vm530, %v681, %v671
        %vm688 = vcmask 1043714
        %vm689 = vcmask 1047558
        %vm690 = vmor %vm689, %vm688
        %691 = vst.msk [vmem:[#allocation2] sm:$0xcc] %vm690, %v676
        %692 = vst [vmem:[#allocation2 + $0x8] sm:$0xcc] %v678
        %693 = vst [vmem:[#allocation2 + $0x10] sm:$0xcc] %v680
        %694 = vst [vmem:[#allocation2 + $0x18] sm:$0xcc] %v682
        %vm695 = vcmask 257026
        %696 = vst.msk [vmem:[#allocation2 + $0x20] sm:$0xc] %vm695, %v675
        %v701 = vcombine.low %v388, %v391
        %v702 = vcombine.high %v388, %v391
        %v703 = vcombine.low %v396, %v399
        %v704 = vcombine.high %v396, %v399
        %v706 = vunpack.c.l.s4 1966171168
        %v707 = vunpack.c.0.s8 %v706
        %v708 = vlaneseq
        %v709 = vshrl.u32 %v708, 7
        %v710 = vsub.s32 %v707, %v709
        %v711 = vrot.slane %v701, %v710
        %v713 = vunpack.c.l.s4 1966171168
        %v714 = vunpack.c.0.s8 %v713
        %v715 = vlaneseq
        %v716 = vshrl.u32 %v715, 7
        %v717 = vsub.s32 %v714, %v716
        %v718 = vrot.slane %v702, %v717
        %v720 = vunpack.c.l.s4 1966171168
        %v721 = vunpack.c.0.s8 %v720
        %v722 = vlaneseq
        %v723 = vshrl.u32 %v722, 7
        %v724 = vsub.s32 %v721, %v723
        %v725 = vrot.slane %v703, %v724
        %v727 = vunpack.c.l.s4 1966171168
        %v728 = vunpack.c.0.s8 %v727
        %v729 = vlaneseq
        %v730 = vshrl.u32 %v729, 7
        %v731 = vsub.s32 %v728, %v730
        %v732 = vrot.slane %v704, %v731
        %v733 = vcombine.low %v711, %v725
        %v734 = vcombine.high %v711, %v725
        %v735 = vcombine.low %v718, %v732
        %v736 = vcombine.high %v718, %v732
        %v738 = vunpack.c.l.s4 1966171168
        %v739 = vunpack.c.0.s8 %v738
        %v740 = vlaneseq
        %v741 = vshrl.u32 %v740, 7
        %v742 = vsub.s32 %v739, %v741
        %v743 = vrot.slane %v733, %v742
        %v745 = vunpack.c.l.s4 1966171168
        %v746 = vunpack.c.0.s8 %v745
        %v747 = vlaneseq
        %v748 = vshrl.u32 %v747, 7
        %v749 = vsub.s32 %v746, %v748
        %v750 = vrot.slane %v735, %v749
        %v752 = vunpack.c.l.s4 1966171168
        %v753 = vunpack.c.0.s8 %v752
        %v754 = vlaneseq
        %v755 = vshrl.u32 %v754, 7
        %v756 = vsub.s32 %v753, %v755
        %v757 = vrot.slane %v734, %v756
        %v759 = vunpack.c.l.s4 1966171168
        %v760 = vunpack.c.0.s8 %v759
        %v761 = vlaneseq
        %v762 = vshrl.u32 %v761, 7
        %v763 = vsub.s32 %v760, %v762
        %v764 = vrot.slane %v736, %v763
        %v765 = vcombine.high %v743, %v743
        %v766 = vcombine.high %v750, %v750
        %v767 = vcombine.high %v757, %v757
        %v768 = vcombine.high %v764, %v764
        %v777 = vpack.c.bf16 %v743, %v743
        %v778 = vpack.c.bf16 %v757, %v757
        %v779 = vpack.c.bf16 %v765, %v765
        %v780 = vpack.c.bf16 %v767, %v767
        %v781 = vpack.c.bf16 %v750, %v750
        %v782 = vpack.c.bf16 %v764, %v764
        %v783 = vpack.c.bf16 %v766, %v766
        %v784 = vpack.c.bf16 %v768, %v768
        %v793 = vunpack.c.l.b16 %v777
        %v794 = vunpack.c.l.b16 %v778
        %v795 = vunpack.c.l.b16 %v779
        %v796 = vunpack.c.l.b16 %v780
        %v797 = vunpack.c.l.b16 %v781
        %v798 = vunpack.c.l.b16 %v782
        %v799 = vunpack.c.l.b16 %v783
        %v800 = vunpack.c.l.b16 %v784
        %v801 = vpack.c.b16 %v794, %v793
        %v802 = vpack.c.b16 %v796, %v795
        %v803 = vpack.c.b16 %v798, %v797
        %v804 = vpack.c.b16 %v800, %v799
        %805 = vrot.lane.b32.xlu0 %v801, 32
        %v806 = vpop.permute.xlu0 %805
        %807 = vrot.lane.b32.xlu0 %v802, 32
        %v808 = vpop.permute.xlu0 %807
        %809 = vrot.lane.b32.xlu0 %v803, 32
        %v810 = vpop.permute.xlu0 %809
        %811 = vrot.lane.b32.xlu0 %v804, 32
        %v812 = vpop.permute.xlu0 %811
        %v813 = vrot.slane %v806, 4
        %v814 = vrot.slane %v808, 4
        %v815 = vrot.slane %v810, 4
        %v816 = vrot.slane %v812, 4
        %v817 = vsel %vm530, %v813, %v806
        %v818 = vsel %vm532, %v813, %v814
        %v819 = vsel %vm530, %v818, %v808
        %v820 = vsel %vm532, %v814, %v815
        %v821 = vsel %vm530, %v820, %v810
        %v822 = vsel %vm532, %v815, %v816
        %v823 = vsel %vm530, %v822, %v812
        %829 = vst.msk [vmem:[#allocation2 + $0x24] sm:$0x33] %vm546, %v817
        %830 = vst [vmem:[#allocation2 + $0x2c] sm:$0x33] %v819
        %831 = vst [vmem:[#allocation2 + $0x34] sm:$0x33] %v821
        %832 = vst [vmem:[#allocation2 + $0x3c] sm:$0x33] %v823
        %833 = vst.msk [vmem:[#allocation2 + $0x44] sm:$0x3] %vm404, %v816
      $region40: #{up_conv_forward.1} parent=35 // pred_fallthru
        _
      %v834 = vld [vmem:[%s240] sm:$0xf]
      %v835 = vld [vmem:[#allocation2] sm:$0xff]
      %v836 = vld [vmem:[#allocation2 + $0x8] sm:$0xff]
      %v837 = vld [vmem:[#allocation2 + $0x10] sm:$0xff]
      %v838 = vld [vmem:[#allocation2 + $0x18] sm:$0xff]
      %v839 = vld [vmem:[#allocation2 + $0x24] sm:$0x33]
      %v840 = vld [vmem:[#allocation2 + $0x2c] sm:$0x33]
      %v841 = vld [vmem:[#allocation2 + $0x34] sm:$0x33]
      %v842 = vld [vmem:[#allocation2 + $0x3c] sm:$0x33]
      %s843 = scalar_lea.vmem %s240, 4
      %v844 = vld [vmem:[%s843] sm:$0xf]
      %v845 = vld [vmem:[#allocation2 + $0x20] sm:$0xf]
      %v846 = vld [vmem:[#allocation2 + $0x44] sm:$0x3]
      %v857 = vunpack.c.l.b16 %v835
      %v858 = vunpack.c.h.b16 %v835
      %v859 = vunpack.c.l.b16 %v836
      %v860 = vunpack.c.h.b16 %v836
      %v861 = vunpack.c.l.b16 %v837
      %v862 = vunpack.c.h.b16 %v837
      %v863 = vunpack.c.l.b16 %v838
      %v864 = vunpack.c.h.b16 %v838
      %v865 = vunpack.c.l.b16 %v845
      %v866 = vunpack.c.l.b16 %v839
      %v867 = vunpack.c.h.b16 %v839
      %v868 = vunpack.c.l.b16 %v840
      %v869 = vunpack.c.h.b16 %v840
      %v870 = vunpack.c.l.b16 %v841
      %v871 = vunpack.c.h.b16 %v841
      %v872 = vunpack.c.l.b16 %v842
      %v873 = vunpack.c.h.b16 %v842
      %v874 = vunpack.c.l.b16 %v846
      %v875 = vpack.c.b16 %v866, %v857
      %v876 = vpack.c.b16 %v867, %v858
      %v877 = vpack.c.b16 %v868, %v859
      %v878 = vpack.c.b16 %v869, %v860
      %v879 = vpack.c.b16 %v870, %v861
      %v880 = vpack.c.b16 %v871, %v862
      %v881 = vpack.c.b16 %v872, %v863
      %v882 = vpack.c.b16 %v873, %v864
      %v883 = vpack.c.b16 %v874, %v865
      %884 = vrot.lane.b32.xlu0 %v875, 96
      %v885 = vpop.permute.xlu0 %884
      %886 = vrot.lane.b32.xlu0 %v876, 96
      %v887 = vpop.permute.xlu0 %886
      %888 = vrot.lane.b32.xlu0 %v877, 96
      %v889 = vpop.permute.xlu0 %888
      %890 = vrot.lane.b32.xlu0 %v878, 96
      %v891 = vpop.permute.xlu0 %890
      %892 = vrot.lane.b32.xlu0 %v879, 96
      %v893 = vpop.permute.xlu0 %892
      %894 = vrot.lane.b32.xlu0 %v880, 96
      %v895 = vpop.permute.xlu0 %894
      %896 = vrot.lane.b32.xlu0 %v881, 96
      %v897 = vpop.permute.xlu0 %896
      %898 = vrot.lane.b32.xlu0 %v882, 96
      %v899 = vpop.permute.xlu0 %898
      %900 = vrot.lane.b32.xlu0 %v883, 96
      %v901 = vpop.permute.xlu0 %900
      %vm902 = vcmask 785408
      %v903 = vsel %vm902, %v885, %v887
      %v904 = vsel %vm902, %v887, %v889
      %v905 = vsel %vm902, %v889, %v891
      %v906 = vsel %vm902, %v891, %v893
      %v907 = vsel %vm902, %v893, %v895
      %v908 = vsel %vm902, %v895, %v897
      %v909 = vsel %vm902, %v897, %v899
      %v910 = vsel %vm902, %v899, %v901
      %vm911 = vcmask 97280
      %v913 = vsel %vm911, %v844, 0
      %vm915 = vcmask 1045504
      %v917 = vsel %vm915, %v903, 0
      %v920 = vsel %vm915, %v904, 0
      %v923 = vsel %vm915, %v905, 0
      %v926 = vsel %vm915, %v906, 0
      %v929 = vsel %vm915, %v907, 0
      %v932 = vsel %vm915, %v908, 0
      %v935 = vsel %vm915, %v909, 0
      %v938 = vsel %vm915, %v910, 0
      %940 = vmatprep.subr.bf16.mxu0 %v920
      %941 = vmatpush1.bf16.msra.mxu0 %v917
      %942 = vmatprep.subr.bf16.mxu0 0
      %943 = vmatpush1.bf16.msra.mxu0 0
      %944 = vmatprep.subr.bf16.mxu0 0
      %945 = vmatpush1.bf16.msra.mxu0 0
      %946 = vmatprep.subr.bf16.mxu0 0
      %947 = vmatpush1.bf16.msra.mxu0 0
      %948 = vmatprep.subr.bf16.mxu0 0
      %949 = vmatpush1.bf16.msra.mxu0 0
      %950 = vmatprep.subr.bf16.mxu0 0
      %951 = vmatpush1.bf16.msra.mxu0 0
      %952 = vmatprep.subr.bf16.mxu0 0
      %953 = vmatpush1.bf16.msra.mxu0 0
      %954 = vmatprep.subr.bf16.mxu0 0
      %955 = vmatpush1.bf16.msra.mxu0 0
      %956 = vmatprep.subr.bf16.mxu0 0
      %957 = vmatpush1.bf16.msra.mxu0 0
      %958 = vmatprep.subr.bf16.mxu0 0
      %959 = vmatpush1.bf16.msra.mxu0 0
      %960 = vmatprep.subr.bf16.mxu0 0
      %961 = vmatpush1.bf16.msra.mxu0 0
      %962 = vmatprep.subr.bf16.mxu0 0
      %963 = vmatpush1.bf16.msra.mxu0 0
      %964 = vmatprep.subr.bf16.mxu0 0
      %965 = vmatpush1.bf16.msra.mxu0 0
      %966 = vmatprep.subr.bf16.mxu0 0
      %967 = vmatpush1.bf16.msra.mxu0 0
      %968 = vmatprep.subr.bf16.mxu0 0
      %969 = vmatpush1.bf16.msra.mxu0 0
      %970 = vmatprep.subr.bf16.mxu0 0
      %971 = vmatpush1.bf16.msra.mxu0 0
      %972 = vmatprep.mubr.bf16.mxu0 0
      %973 = vmatmul.mubr.bf16.gmra.mrb[0].mxu0 %v913
      %v974 = vpop.f32.mrb[0].mxu0
      %v975 = vadd.f32 0.0, %v974
      %v976 = vpop.f32.mrb[0].mxu0
      %v977 = vadd.f32 0.0, %v976
      %v978 = vpop.f32.mrb[0].mxu0
      %v979 = vpop.f32.mrb[0].mxu0
      %980 = vdwg.mxu0
      %981 = vmatprep.subr.bf16.mxu0 %v926
      %982 = vmatpush1.bf16.msra.mxu0 %v923
      %983 = vmatprep.subr.bf16.mxu0 0
      %984 = vmatpush1.bf16.msra.mxu0 0
      %985 = vmatprep.subr.bf16.mxu0 0
      %986 = vmatpush1.bf16.msra.mxu0 0
      %987 = vmatprep.subr.bf16.mxu0 0
      %988 = vmatpush1.bf16.msra.mxu0 0
      %989 = vmatprep.subr.bf16.mxu0 0
      %990 = vmatpush1.bf16.msra.mxu0 0
      %991 = vmatprep.subr.bf16.mxu0 0
      %992 = vmatpush1.bf16.msra.mxu0 0
      %993 = vmatprep.subr.bf16.mxu0 0
      %994 = vmatpush1.bf16.msra.mxu0 0
      %995 = vmatprep.subr.bf16.mxu0 0
      %996 = vmatpush1.bf16.msra.mxu0 0
      %997 = vmatprep.subr.bf16.mxu0 0
      %998 = vmatpush1.bf16.msra.mxu0 0
      %999 = vmatprep.subr.bf16.mxu0 0
      %1000 = vmatpush1.bf16.msra.mxu0 0
      %1001 = vmatprep.subr.bf16.mxu0 0
      %1002 = vmatpush1.bf16.msra.mxu0 0
      %1003 = vmatprep.subr.bf16.mxu0 0
      %1004 = vmatpush1.bf16.msra.mxu0 0
      %1005 = vmatprep.subr.bf16.mxu0 0
      %1006 = vmatpush1.bf16.msra.mxu0 0
      %1007 = vmatprep.subr.bf16.mxu0 0
      %1008 = vmatpush1.bf16.msra.mxu0 0
      %1009 = vmatprep.subr.bf16.mxu0 0
      %1010 = vmatpush1.bf16.msra.mxu0 0
      %1011 = vmatprep.subr.bf16.mxu0 0
      %1012 = vmatpush1.bf16.msra.mxu0 0
      %1013 = vmatprep.mubr.bf16.mxu0 0
      %1014 = vmatmul.mubr.bf16.gmra.mrb[0].mxu0 %v913
      %v1015 = vpop.f32.mrb[0].mxu0
      %v1016 = vadd.f32 0.0, %v1015
      %v1017 = vpop.f32.mrb[0].mxu0
      %v1018 = vadd.f32 0.0, %v1017
      %v1019 = vpop.f32.mrb[0].mxu0
      %v1020 = vpop.f32.mrb[0].mxu0
      %1021 = vdwg.mxu0
      %1022 = vmatprep.subr.bf16.mxu0 %v932
      %1023 = vmatpush1.bf16.msra.mxu0 %v929
      %1024 = vmatprep.subr.bf16.mxu0 0
      %1025 = vmatpush1.bf16.msra.mxu0 0
      %1026 = vmatprep.subr.bf16.mxu0 0
      %1027 = vmatpush1.bf16.msra.mxu0 0
      %1028 = vmatprep.subr.bf16.mxu0 0
      %1029 = vmatpush1.bf16.msra.mxu0 0
      %1030 = vmatprep.subr.bf16.mxu0 0
      %1031 = vmatpush1.bf16.msra.mxu0 0
      %1032 = vmatprep.subr.bf16.mxu0 0
      %1033 = vmatpush1.bf16.msra.mxu0 0
      %1034 = vmatprep.subr.bf16.mxu0 0
      %1035 = vmatpush1.bf16.msra.mxu0 0
      %1036 = vmatprep.subr.bf16.mxu0 0
      %1037 = vmatpush1.bf16.msra.mxu0 0
      %1038 = vmatprep.subr.bf16.mxu0 0
      %1039 = vmatpush1.bf16.msra.mxu0 0
      %1040 = vmatprep.subr.bf16.mxu0 0
      %1041 = vmatpush1.bf16.msra.mxu0 0
      %1042 = vmatprep.subr.bf16.mxu0 0
      %1043 = vmatpush1.bf16.msra.mxu0 0
      %1044 = vmatprep.subr.bf16.mxu0 0
      %1045 = vmatpush1.bf16.msra.mxu0 0
      %1046 = vmatprep.subr.bf16.mxu0 0
      %1047 = vmatpush1.bf16.msra.mxu0 0
      %1048 = vmatprep.subr.bf16.mxu0 0
      %1049 = vmatpush1.bf16.msra.mxu0 0
      %1050 = vmatprep.subr.bf16.mxu0 0
      %1051 = vmatpush1.bf16.msra.mxu0 0
      %1052 = vmatprep.subr.bf16.mxu0 0
      %1053 = vmatpush1.bf16.msra.mxu0 0
      %1054 = vmatprep.mubr.bf16.mxu0 0
      %1055 = vmatmul.mubr.bf16.gmra.mrb[0].mxu0 %v913
      %v1056 = vpop.f32.mrb[0].mxu0
      %v1057 = vadd.f32 0.0, %v1056
      %v1058 = vpop.f32.mrb[0].mxu0
      %v1059 = vadd.f32 0.0, %v1058
      %v1060 = vpop.f32.mrb[0].mxu0
      %v1061 = vpop.f32.mrb[0].mxu0
      %1062 = vdwg.mxu0
      %1063 = vmatprep.subr.bf16.mxu0 %v938
      %1064 = vmatpush1.bf16.msra.mxu0 %v935
      %1065 = vmatprep.subr.bf16.mxu0 0
      %1066 = vmatpush1.bf16.msra.mxu0 0
      %1067 = vmatprep.subr.bf16.mxu0 0
      %1068 = vmatpush1.bf16.msra.mxu0 0
      %1069 = vmatprep.subr.bf16.mxu0 0
      %1070 = vmatpush1.bf16.msra.mxu0 0
      %1071 = vmatprep.subr.bf16.mxu0 0
      %1072 = vmatpush1.bf16.msra.mxu0 0
      %1073 = vmatprep.subr.bf16.mxu0 0
      %1074 = vmatpush1.bf16.msra.mxu0 0
      %1075 = vmatprep.subr.bf16.mxu0 0
      %1076 = vmatpush1.bf16.msra.mxu0 0
      %1077 = vmatprep.subr.bf16.mxu0 0
      %1078 = vmatpush1.bf16.msra.mxu0 0
      %1079 = vmatprep.subr.bf16.mxu0 0
      %1080 = vmatpush1.bf16.msra.mxu0 0
      %1081 = vmatprep.subr.bf16.mxu0 0
      %1082 = vmatpush1.bf16.msra.mxu0 0
      %1083 = vmatprep.subr.bf16.mxu0 0
      %1084 = vmatpush1.bf16.msra.mxu0 0
      %1085 = vmatprep.subr.bf16.mxu0 0
      %1086 = vmatpush1.bf16.msra.mxu0 0
      %1087 = vmatprep.subr.bf16.mxu0 0
      %1088 = vmatpush1.bf16.msra.mxu0 0
      %1089 = vmatprep.subr.bf16.mxu0 0
      %1090 = vmatpush1.bf16.msra.mxu0 0
      %1091 = vmatprep.subr.bf16.mxu0 0
      %1092 = vmatpush1.bf16.msra.mxu0 0
      %1093 = vmatprep.subr.bf16.mxu0 0
      %1094 = vmatpush1.bf16.msra.mxu0 0
      %1095 = vmatprep.mubr.bf16.mxu0 0
      %1096 = vmatmul.mubr.bf16.gmra.mrb[0].mxu0 %v913
      %v1097 = vpop.f32.mrb[0].mxu0
      %v1098 = vadd.f32 0.0, %v1097
      %v1099 = vpop.f32.mrb[0].mxu0
      %v1100 = vadd.f32 0.0, %v1099
      %v1101 = vpop.f32.mrb[0].mxu0
      %v1102 = vpop.f32.mrb[0].mxu0
      %1103 = vdwg.mxu0
      %v1105 = vsel %vm911, %v834, 0
      %v1108 = vsel %vm915, %v875, 0
      %v1111 = vsel %vm915, %v876, 0
      %v1114 = vsel %vm915, %v877, 0
      %v1117 = vsel %vm915, %v878, 0
      %v1120 = vsel %vm915, %v879, 0
      %v1123 = vsel %vm915, %v880, 0
      %v1126 = vsel %vm915, %v881, 0
      %v1129 = vsel %vm915, %v882, 0
      %1131 = vmatprep.subr.bf16.mxu0 %v1111
      %1132 = vmatpush1.bf16.msra.mxu0 %v1108
      %1133 = vmatprep.subr.bf16.mxu0 0
      %1134 = vmatpush1.bf16.msra.mxu0 0
      %1135 = vmatprep.subr.bf16.mxu0 0
      %1136 = vmatpush1.bf16.msra.mxu0 0
      %1137 = vmatprep.subr.bf16.mxu0 0
      %1138 = vmatpush1.bf16.msra.mxu0 0
      %1139 = vmatprep.subr.bf16.mxu0 0
      %1140 = vmatpush1.bf16.msra.mxu0 0
      %1141 = vmatprep.subr.bf16.mxu0 0
      %1142 = vmatpush1.bf16.msra.mxu0 0
      %1143 = vmatprep.subr.bf16.mxu0 0
      %1144 = vmatpush1.bf16.msra.mxu0 0
      %1145 = vmatprep.subr.bf16.mxu0 0
      %1146 = vmatpush1.bf16.msra.mxu0 0
      %1147 = vmatprep.subr.bf16.mxu0 0
      %1148 = vmatpush1.bf16.msra.mxu0 0
      %1149 = vmatprep.subr.bf16.mxu0 0
      %1150 = vmatpush1.bf16.msra.mxu0 0
      %1151 = vmatprep.subr.bf16.mxu0 0
      %1152 = vmatpush1.bf16.msra.mxu0 0
      %1153 = vmatprep.subr.bf16.mxu0 0
      %1154 = vmatpush1.bf16.msra.mxu0 0
      %1155 = vmatprep.subr.bf16.mxu0 0
      %1156 = vmatpush1.bf16.msra.mxu0 0
      %1157 = vmatprep.subr.bf16.mxu0 0
      %1158 = vmatpush1.bf16.msra.mxu0 0
      %1159 = vmatprep.subr.bf16.mxu0 0
      %1160 = vmatpush1.bf16.msra.mxu0 0
      %1161 = vmatprep.subr.bf16.mxu0 0
      %1162 = vmatpush1.bf16.msra.mxu0 0
      %1163 = vmatprep.mubr.bf16.mxu0 0
      %1164 = vmatmul.mubr.bf16.gmra.mrb[0].mxu0 %v1105
      %v1165 = vpop.f32.mrb[0].mxu0
      %v1166 = vadd.f32 %v975, %v1165
      %v1167 = vpop.f32.mrb[0].mxu0
      %v1168 = vadd.f32 %v977, %v1167
      %v1169 = vpop.f32.mrb[0].mxu0
      %v1170 = vpop.f32.mrb[0].mxu0
      %1171 = vdwg.mxu0
      %1172 = vmatprep.subr.bf16.mxu0 %v1117
      %1173 = vmatpush1.bf16.msra.mxu0 %v1114
      %1174 = vmatprep.subr.bf16.mxu0 0
      %1175 = vmatpush1.bf16.msra.mxu0 0
      %1176 = vmatprep.subr.bf16.mxu0 0
      %1177 = vmatpush1.bf16.msra.mxu0 0
      %1178 = vmatprep.subr.bf16.mxu0 0
      %1179 = vmatpush1.bf16.msra.mxu0 0
      %1180 = vmatprep.subr.bf16.mxu0 0
      %1181 = vmatpush1.bf16.msra.mxu0 0
      %1182 = vmatprep.subr.bf16.mxu0 0
      %1183 = vmatpush1.bf16.msra.mxu0 0
      %1184 = vmatprep.subr.bf16.mxu0 0
      %1185 = vmatpush1.bf16.msra.mxu0 0
      %1186 = vmatprep.subr.bf16.mxu0 0
      %1187 = vmatpush1.bf16.msra.mxu0 0
      %1188 = vmatprep.subr.bf16.mxu0 0
      %1189 = vmatpush1.bf16.msra.mxu0 0
      %1190 = vmatprep.subr.bf16.mxu0 0
      %1191 = vmatpush1.bf16.msra.mxu0 0
      %1192 = vmatprep.subr.bf16.mxu0 0
      %1193 = vmatpush1.bf16.msra.mxu0 0
      %1194 = vmatprep.subr.bf16.mxu0 0
      %1195 = vmatpush1.bf16.msra.mxu0 0
      %1196 = vmatprep.subr.bf16.mxu0 0
      %1197 = vmatpush1.bf16.msra.mxu0 0
      %1198 = vmatprep.subr.bf16.mxu0 0
      %1199 = vmatpush1.bf16.msra.mxu0 0
      %1200 = vmatprep.subr.bf16.mxu0 0
      %1201 = vmatpush1.bf16.msra.mxu0 0
      %1202 = vmatprep.subr.bf16.mxu0 0
      %1203 = vmatpush1.bf16.msra.mxu0 0
      %1204 = vmatprep.mubr.bf16.mxu0 0
      %1205 = vmatmul.mubr.bf16.gmra.mrb[0].mxu0 %v1105
      %v1206 = vpop.f32.mrb[0].mxu0
      %v1207 = vadd.f32 %v1016, %v1206
      %v1208 = vpop.f32.mrb[0].mxu0
      %v1209 = vadd.f32 %v1018, %v1208
      %v1210 = vpop.f32.mrb[0].mxu0
      %v1211 = vpop.f32.mrb[0].mxu0
      %1212 = vdwg.mxu0
      %1213 = vmatprep.subr.bf16.mxu0 %v1123
      %1214 = vmatpush1.bf16.msra.mxu0 %v1120
      %1215 = vmatprep.subr.bf16.mxu0 0
      %1216 = vmatpush1.bf16.msra.mxu0 0
      %1217 = vmatprep.subr.bf16.mxu0 0
      %1218 = vmatpush1.bf16.msra.mxu0 0
      %1219 = vmatprep.subr.bf16.mxu0 0
      %1220 = vmatpush1.bf16.msra.mxu0 0
      %1221 = vmatprep.subr.bf16.mxu0 0
      %1222 = vmatpush1.bf16.msra.mxu0 0
      %1223 = vmatprep.subr.bf16.mxu0 0
      %1224 = vmatpush1.bf16.msra.mxu0 0
      %1225 = vmatprep.subr.bf16.mxu0 0
      %1226 = vmatpush1.bf16.msra.mxu0 0
      %1227 = vmatprep.subr.bf16.mxu0 0
      %1228 = vmatpush1.bf16.msra.mxu0 0
      %1229 = vmatprep.subr.bf16.mxu0 0
      %1230 = vmatpush1.bf16.msra.mxu0 0
      %1231 = vmatprep.subr.bf16.mxu0 0
      %1232 = vmatpush1.bf16.msra.mxu0 0
      %1233 = vmatprep.subr.bf16.mxu0 0
      %1234 = vmatpush1.bf16.msra.mxu0 0
      %1235 = vmatprep.subr.bf16.mxu0 0
      %1236 = vmatpush1.bf16.msra.mxu0 0
      %1237 = vmatprep.subr.bf16.mxu0 0
      %1238 = vmatpush1.bf16.msra.mxu0 0
      %1239 = vmatprep.subr.bf16.mxu0 0
      %1240 = vmatpush1.bf16.msra.mxu0 0
      %1241 = vmatprep.subr.bf16.mxu0 0
      %1242 = vmatpush1.bf16.msra.mxu0 0
      %1243 = vmatprep.subr.bf16.mxu0 0
      %1244 = vmatpush1.bf16.msra.mxu0 0
      %1245 = vmatprep.mubr.bf16.mxu0 0
      %1246 = vmatmul.mubr.bf16.gmra.mrb[0].mxu0 %v1105
      %v1247 = vpop.f32.mrb[0].mxu0
      %v1248 = vadd.f32 %v1057, %v1247
      %v1249 = vpop.f32.mrb[0].mxu0
      %v1250 = vadd.f32 %v1059, %v1249
      %v1251 = vpop.f32.mrb[0].mxu0
      %v1252 = vpop.f32.mrb[0].mxu0
      %1253 = vdwg.mxu0
      %1254 = vmatprep.subr.bf16.mxu0 %v1129
      %1255 = vmatpush1.bf16.msra.mxu0 %v1126
      %1256 = vmatprep.subr.bf16.mxu0 0
      %1257 = vmatpush1.bf16.msra.mxu0 0
      %1258 = vmatprep.subr.bf16.mxu0 0
      %1259 = vmatpush1.bf16.msra.mxu0 0
      %1260 = vmatprep.subr.bf16.mxu0 0
      %1261 = vmatpush1.bf16.msra.mxu0 0
      %1262 = vmatprep.subr.bf16.mxu0 0
      %1263 = vmatpush1.bf16.msra.mxu0 0
      %1264 = vmatprep.subr.bf16.mxu0 0
      %1265 = vmatpush1.bf16.msra.mxu0 0
      %1266 = vmatprep.subr.bf16.mxu0 0
      %1267 = vmatpush1.bf16.msra.mxu0 0
      %1268 = vmatprep.subr.bf16.mxu0 0
      %1269 = vmatpush1.bf16.msra.mxu0 0
      %1270 = vmatprep.subr.bf16.mxu0 0
      %1271 = vmatpush1.bf16.msra.mxu0 0
      %1272 = vmatprep.subr.bf16.mxu0 0
      %1273 = vmatpush1.bf16.msra.mxu0 0
      %1274 = vmatprep.subr.bf16.mxu0 0
      %1275 = vmatpush1.bf16.msra.mxu0 0
      %1276 = vmatprep.subr.bf16.mxu0 0
      %1277 = vmatpush1.bf16.msra.mxu0 0
      %1278 = vmatprep.subr.bf16.mxu0 0
      %1279 = vmatpush1.bf16.msra.mxu0 0
      %1280 = vmatprep.subr.bf16.mxu0 0
      %1281 = vmatpush1.bf16.msra.mxu0 0
      %1282 = vmatprep.subr.bf16.mxu0 0
      %1283 = vmatpush1.bf16.msra.mxu0 0
      %1284 = vmatprep.subr.bf16.mxu0 0
      %1285 = vmatpush1.bf16.msra.mxu0 0
      %1286 = vmatprep.mubr.bf16.mxu0 0
      %1287 = vmatmul.mubr.bf16.gmra.mrb[0].mxu0 %v1105
      %v1288 = vpop.f32.mrb[0].mxu0
      %v1289 = vadd.f32 %v1098, %v1288
      %v1290 = vpop.f32.mrb[0].mxu0
      %v1291 = vadd.f32 %v1100, %v1290
      %v1292 = vpop.f32.mrb[0].mxu0
      %v1293 = vpop.f32.mrb[0].mxu0
      %1294 = vdwg.mxu0
      %s1295 = scalar_lea.vmem %s240, 8
      %v1296 = vld [vmem:[%s1295] sm:$0xf]
      %1297 = vrot.lane.b32.xlu0 %v875, 64
      %v1298 = vpop.permute.xlu0 %1297
      %1299 = vrot.lane.b32.xlu0 %v876, 64
      %v1300 = vpop.permute.xlu0 %1299
      %1301 = vrot.lane.b32.xlu0 %v877, 64
      %v1302 = vpop.permute.xlu0 %1301
      %1303 = vrot.lane.b32.xlu0 %v878, 64
      %v1304 = vpop.permute.xlu0 %1303
      %1305 = vrot.lane.b32.xlu0 %v879, 64
      %v1306 = vpop.permute.xlu0 %1305
      %1307 = vrot.lane.b32.xlu0 %v880, 64
      %v1308 = vpop.permute.xlu0 %1307
      %1309 = vrot.lane.b32.xlu0 %v881, 64
      %v1310 = vpop.permute.xlu0 %1309
      %1311 = vrot.lane.b32.xlu0 %v882, 64
      %v1312 = vpop.permute.xlu0 %1311
      %1313 = vrot.lane.b32.xlu0 %v883, 64
      %v1314 = vpop.permute.xlu0 %1313
      %vm1315 = vcmask 523264
      %v1316 = vsel %vm1315, %v1298, %v1300
      %v1317 = vsel %vm1315, %v1300, %v1302
      %v1318 = vsel %vm1315, %v1302, %v1304
      %v1319 = vsel %vm1315, %v1304, %v1306
      %v1320 = vsel %vm1315, %v1306, %v1308
      %v1321 = vsel %vm1315, %v1308, %v1310
      %v1322 = vsel %vm1315, %v1310, %v1312
      %v1323 = vsel %vm1315, %v1312, %v1314
      %v1325 = vsel %vm911, %v1296, 0
      %v1328 = vsel %vm915, %v1316, 0
      %v1331 = vsel %vm915, %v1317, 0
      %v1334 = vsel %vm915, %v1318, 0
      %v1337 = vsel %vm915, %v1319, 0
      %v1340 = vsel %vm915, %v1320, 0
      %v1343 = vsel %vm915, %v1321, 0
      %v1346 = vsel %vm915, %v1322, 0
      %v1349 = vsel %vm915, %v1323, 0
      %1351 = vmatprep.subr.bf16.mxu0 %v1331
      %1352 = vmatpush1.bf16.msra.mxu0 %v1328
      %1353 = vmatprep.subr.bf16.mxu0 0
      %1354 = vmatpush1.bf16.msra.mxu0 0
      %1355 = vmatprep.subr.bf16.mxu0 0
      %1356 = vmatpush1.bf16.msra.mxu0 0
      %1357 = vmatprep.subr.bf16.mxu0 0
      %1358 = vmatpush1.bf16.msra.mxu0 0
      %1359 = vmatprep.subr.bf16.mxu0 0
      %1360 = vmatpush1.bf16.msra.mxu0 0
      %1361 = vmatprep.subr.bf16.mxu0 0
      %1362 = vmatpush1.bf16.msra.mxu0 0
      %1363 = vmatprep.subr.bf16.mxu0 0
      %1364 = vmatpush1.bf16.msra.mxu0 0
      %1365 = vmatprep.subr.bf16.mxu0 0
      %1366 = vmatpush1.bf16.msra.mxu0 0
      %1367 = vmatprep.subr.bf16.mxu0 0
      %1368 = vmatpush1.bf16.msra.mxu0 0
      %1369 = vmatprep.subr.bf16.mxu0 0
      %1370 = vmatpush1.bf16.msra.mxu0 0
      %1371 = vmatprep.subr.bf16.mxu0 0
      %1372 = vmatpush1.bf16.msra.mxu0 0
      %1373 = vmatprep.subr.bf16.mxu0 0
      %1374 = vmatpush1.bf16.msra.mxu0 0
      %1375 = vmatprep.subr.bf16.mxu0 0
      %1376 = vmatpush1.bf16.msra.mxu0 0
      %1377 = vmatprep.subr.bf16.mxu0 0
      %1378 = vmatpush1.bf16.msra.mxu0 0
      %1379 = vmatprep.subr.bf16.mxu0 0
      %1380 = vmatpush1.bf16.msra.mxu0 0
      %1381 = vmatprep.subr.bf16.mxu0 0
      %1382 = vmatpush1.bf16.msra.mxu0 0
      %1383 = vmatprep.mubr.bf16.mxu0 0
      %1384 = vmatmul.mubr.bf16.gmra.mrb[0].mxu0 %v1325
      %v1385 = vpop.f32.mrb[0].mxu0
      %v1386 = vadd.f32 0.0, %v1385
      %v1387 = vpop.f32.mrb[0].mxu0
      %v1388 = vadd.f32 0.0, %v1387
      %v1389 = vpop.f32.mrb[0].mxu0
      %v1390 = vpop.f32.mrb[0].mxu0
      %1391 = vdwg.mxu0
      %1392 = vmatprep.subr.bf16.mxu0 %v1337
      %1393 = vmatpush1.bf16.msra.mxu0 %v1334
      %1394 = vmatprep.subr.bf16.mxu0 0
      %1395 = vmatpush1.bf16.msra.mxu0 0
      %1396 = vmatprep.subr.bf16.mxu0 0
      %1397 = vmatpush1.bf16.msra.mxu0 0
      %1398 = vmatprep.subr.bf16.mxu0 0
      %1399 = vmatpush1.bf16.msra.mxu0 0
      %1400 = vmatprep.subr.bf16.mxu0 0
      %1401 = vmatpush1.bf16.msra.mxu0 0
      %1402 = vmatprep.subr.bf16.mxu0 0
      %1403 = vmatpush1.bf16.msra.mxu0 0
      %1404 = vmatprep.subr.bf16.mxu0 0
      %1405 = vmatpush1.bf16.msra.mxu0 0
      %1406 = vmatprep.subr.bf16.mxu0 0
      %1407 = vmatpush1.bf16.msra.mxu0 0
      %1408 = vmatprep.subr.bf16.mxu0 0
      %1409 = vmatpush1.bf16.msra.mxu0 0
      %1410 = vmatprep.subr.bf16.mxu0 0
      %1411 = vmatpush1.bf16.msra.mxu0 0
      %1412 = vmatprep.subr.bf16.mxu0 0
      %1413 = vmatpush1.bf16.msra.mxu0 0
      %1414 = vmatprep.subr.bf16.mxu0 0
      %1415 = vmatpush1.bf16.msra.mxu0 0
      %1416 = vmatprep.subr.bf16.mxu0 0
      %1417 = vmatpush1.bf16.msra.mxu0 0
      %1418 = vmatprep.subr.bf16.mxu0 0
      %1419 = vmatpush1.bf16.msra.mxu0 0
      %1420 = vmatprep.subr.bf16.mxu0 0
      %1421 = vmatpush1.bf16.msra.mxu0 0
      %1422 = vmatprep.subr.bf16.mxu0 0
      %1423 = vmatpush1.bf16.msra.mxu0 0
      %1424 = vmatprep.mubr.bf16.mxu0 0
      %1425 = vmatmul.mubr.bf16.gmra.mrb[0].mxu0 %v1325
      %v1426 = vpop.f32.mrb[0].mxu0
      %v1427 = vadd.f32 0.0, %v1426
      %v1428 = vpop.f32.mrb[0].mxu0
      %v1429 = vadd.f32 0.0, %v1428
      %v1430 = vpop.f32.mrb[0].mxu0
      %v1431 = vpop.f32.mrb[0].mxu0
      %1432 = vdwg.mxu0
      %1433 = vmatprep.subr.bf16.mxu0 %v1343
      %1434 = vmatpush1.bf16.msra.mxu0 %v1340
      %1435 = vmatprep.subr.bf16.mxu0 0
      %1436 = vmatpush1.bf16.msra.mxu0 0
      %1437 = vmatprep.subr.bf16.mxu0 0
      %1438 = vmatpush1.bf16.msra.mxu0 0
      %1439 = vmatprep.subr.bf16.mxu0 0
      %1440 = vmatpush1.bf16.msra.mxu0 0
      %1441 = vmatprep.subr.bf16.mxu0 0
      %1442 = vmatpush1.bf16.msra.mxu0 0
      %1443 = vmatprep.subr.bf16.mxu0 0
      %1444 = vmatpush1.bf16.msra.mxu0 0
      %1445 = vmatprep.subr.bf16.mxu0 0
      %1446 = vmatpush1.bf16.msra.mxu0 0
      %1447 = vmatprep.subr.bf16.mxu0 0
      %1448 = vmatpush1.bf16.msra.mxu0 0
      %1449 = vmatprep.subr.bf16.mxu0 0
      %1450 = vmatpush1.bf16.msra.mxu0 0
      %1451 = vmatprep.subr.bf16.mxu0 0
      %1452 = vmatpush1.bf16.msra.mxu0 0
      %1453 = vmatprep.subr.bf16.mxu0 0
      %1454 = vmatpush1.bf16.msra.mxu0 0
      %1455 = vmatprep.subr.bf16.mxu0 0
      %1456 = vmatpush1.bf16.msra.mxu0 0
      %1457 = vmatprep.subr.bf16.mxu0 0
      %1458 = vmatpush1.bf16.msra.mxu0 0
      %1459 = vmatprep.subr.bf16.mxu0 0
      %1460 = vmatpush1.bf16.msra.mxu0 0
      %1461 = vmatprep.subr.bf16.mxu0 0
      %1462 = vmatpush1.bf16.msra.mxu0 0
      %1463 = vmatprep.subr.bf16.mxu0 0
      %1464 = vmatpush1.bf16.msra.mxu0 0
      %1465 = vmatprep.mubr.bf16.mxu0 0
      %1466 = vmatmul.mubr.bf16.gmra.mrb[0].mxu0 %v1325
      %v1467 = vpop.f32.mrb[0].mxu0
      %v1468 = vadd.f32 0.0, %v1467
      %v1469 = vpop.f32.mrb[0].mxu0
      %v1470 = vadd.f32 0.0, %v1469
      %v1471 = vpop.f32.mrb[0].mxu0
      %v1472 = vpop.f32.mrb[0].mxu0
      %1473 = vdwg.mxu0
      %1474 = vmatprep.subr.bf16.mxu0 %v1349
      %1475 = vmatpush1.bf16.msra.mxu0 %v1346
      %1476 = vmatprep.subr.bf16.mxu0 0
      %1477 = vmatpush1.bf16.msra.mxu0 0
      %1478 = vmatprep.subr.bf16.mxu0 0
      %1479 = vmatpush1.bf16.msra.mxu0 0
      %1480 = vmatprep.subr.bf16.mxu0 0
      %1481 = vmatpush1.bf16.msra.mxu0 0
      %1482 = vmatprep.subr.bf16.mxu0 0
      %1483 = vmatpush1.bf16.msra.mxu0 0
      %1484 = vmatprep.subr.bf16.mxu0 0
      %1485 = vmatpush1.bf16.msra.mxu0 0
      %1486 = vmatprep.subr.bf16.mxu0 0
      %1487 = vmatpush1.bf16.msra.mxu0 0
      %1488 = vmatprep.subr.bf16.mxu0 0
      %1489 = vmatpush1.bf16.msra.mxu0 0
      %1490 = vmatprep.subr.bf16.mxu0 0
      %1491 = vmatpush1.bf16.msra.mxu0 0
      %1492 = vmatprep.subr.bf16.mxu0 0
      %1493 = vmatpush1.bf16.msra.mxu0 0
      %1494 = vmatprep.subr.bf16.mxu0 0
      %1495 = vmatpush1.bf16.msra.mxu0 0
      %1496 = vmatprep.subr.bf16.mxu0 0
      %1497 = vmatpush1.bf16.msra.mxu0 0
      %1498 = vmatprep.subr.bf16.mxu0 0
      %1499 = vmatpush1.bf16.msra.mxu0 0
      %1500 = vmatprep.subr.bf16.mxu0 0
      %1501 = vmatpush1.bf16.msra.mxu0 0
      %1502 = vmatprep.subr.bf16.mxu0 0
      %1503 = vmatpush1.bf16.msra.mxu0 0
      %1504 = vmatprep.subr.bf16.mxu0 0
      %1505 = vmatpush1.bf16.msra.mxu0 0
      %1506 = vmatprep.mubr.bf16.mxu0 0
      %1507 = vmatmul.mubr.bf16.gmra.mrb[0].mxu0 %v1325
      %v1508 = vpop.f32.mrb[0].mxu0
      %v1509 = vadd.f32 0.0, %v1508
      %v1510 = vpop.f32.mrb[0].mxu0
      %v1511 = vadd.f32 0.0, %v1510
      %v1512 = vpop.f32.mrb[0].mxu0
      %v1513 = vpop.f32.mrb[0].mxu0
      %1514 = vdwg.mxu0
      %v1515 = vadd.f32 %v1166, %v1386
      %v1516 = vadd.f32 %v1168, %v1388
      %v1517 = vadd.f32 %v1207, %v1427
      %v1518 = vadd.f32 %v1209, %v1429
      %v1519 = vadd.f32 %v1248, %v1468
      %v1520 = vadd.f32 %v1250, %v1470
      %v1521 = vadd.f32 %v1289, %v1509
      %v1522 = vadd.f32 %v1291, %v1511
      %v1523 = vld [vmem:[%s244] sm:$0xff]
      %1525 = vset.pattern.permute.xlu0 0
      %1526 = vperm.xlu0 %1525, %v1523
      %v1527 = vpop.permute.xlu0 %1526
      %v1529 = vadd.f32 %v1515, %v1527
      %v1530 = vadd.f32 %v1516, %v1527
      %v1531 = vadd.f32 %v1517, %v1527
      %v1532 = vadd.f32 %v1518, %v1527
      %v1533 = vadd.f32 %v1519, %v1527
      %v1534 = vadd.f32 %v1520, %v1527
      %v1535 = vadd.f32 %v1521, %v1527
      %v1536 = vadd.f32 %v1522, %v1527
      %v1537 = vmax.f32 %v1529, 0.0
      %v1538 = vmax.f32 %v1530, 0.0
      %v1539 = vmax.f32 %v1531, 0.0
      %v1540 = vmax.f32 %v1532, 0.0
      %v1541 = vmax.f32 %v1533, 0.0
      %v1542 = vmax.f32 %v1534, 0.0
      %v1543 = vmax.f32 %v1535, 0.0
      %v1544 = vmax.f32 %v1536, 0.0
      %1545 = vst [vmem:[%s253] sm:$0xff] %v1537
      %1546 = vst [vmem:[%s253 + $0x8] sm:$0xff] %v1538
      %1547 = vst [vmem:[%s253 + $0x10] sm:$0xff] %v1539
      %1548 = vst [vmem:[%s253 + $0x18] sm:$0xff] %v1540
      %1549 = vst [vmem:[%s253 + $0x20] sm:$0xff] %v1541
      %1550 = vst [vmem:[%s253 + $0x28] sm:$0xff] %v1542
      %1551 = vst [vmem:[%s253 + $0x30] sm:$0xff] %v1543
      %1552 = vst [vmem:[%s253 + $0x38] sm:$0xff] %v1544
      %p1553 = scmp.lt.s32.totalorder %s19, 1
      %s1554 = scalar_select %p1553, %s19, 1
      %p1555 = scmp.lt.s32.totalorder %s20, 0
      %s1556 = scalar_select %p1555, %s20, 0
      %s1557 = smul.addr %s1556, 8
      %s1558 = smul.addr %s1554, 8
      %s1559 = sadd.s32 %s1557, %s1558
      %s1560 = smul.addr %s1559, 8
      %s1561 = scalar_lea.vmem %s4, %s1560
      // Predicated region
      $region41: #{up_conv_forward.1} parent=35 // pred_check
        %p1562 = pneg %p146
      $region42: #{up_conv_forward.1} parent=35 // pred_check_branch
        %1564 = sbr.rel (%p1562) target = $region44
      $region43: #{up_conv_forward.1} parent=35 // pred_region
        _
      $region44: #{up_conv_forward.1} parent=35 // pred_fallthru
        _
    $region36: #{up_conv_forward.1} parent=5 // pred_fallthru
      _
    %p1565 = scmp.le.s32.totalorder 2, %s10
    // Predicated region
    $region45: #{up_conv_forward.1} parent=5 // pred_check
      %p1566 = pneg %p1565
    $region46: #{up_conv_forward.1} parent=5 // pred_check_branch
      %1568 = sbr.rel (%p1566) target = $region48
    $region47: #{up_conv_forward.1} parent=5 // pred_region
      %s1569 = ssub.s32 %s10, 2
      // Predicated region
      $region49: #{up_conv_forward.1} parent=47 // pred_check
        %p1570 = pneg %p152
      $region50: #{up_conv_forward.1} parent=47 // pred_check_branch
        %1572 = sbr.rel (%p1570) target = $region52
      $region51: #{up_conv_forward.1} parent=47 // pred_region
        %p1573 = scmp.lt.s32.totalorder %s21, 1
        %s1574 = scalar_select %p1573, %s21, 1
        %p1575 = scmp.lt.s32.totalorder %s22, 0
        %s1576 = scalar_select %p1575, %s22, 0
        %s1577 = smul.addr %s1576, 8
        %s1578 = smul.addr %s1574, 8
        %s1579 = sadd.s32 %s1577, %s1578
        %s1580 = smul.addr %s1579, 8
        %s1581 = scalar_lea.vmem %s4, %s1580
      $region52: #{up_conv_forward.1} parent=47 // pred_fallthru
        _
    $region48: #{up_conv_forward.1} parent=5 // pred_fallthru
      _
  $region6: #{up_conv_forward.1} parent=0 // loop_footer
    %s14 = sadd.s32 1, %s10
  $region7: #{up_conv_forward.1} parent=0 // loop_footer_branch
    %9 = sbr.rel target = $region3
  $region8: #{up_conv_forward.1} parent=0 // loop_exit
    _

</llo_original>
